<compile_context>
chip_gen: v5e
topology: v5e:2x2
jax: 0.10.0
libtpu: 0.0.40
codegen_flags: <defaults>
</compile_context>

<pallas_src>
import functools
import math

import jax
import jax.numpy as jnp
from jax.experimental import pallas as pl
from jax.experimental.pallas import tpu as pltpu

LN_EPS = 1e-5  # torch.nn.LayerNorm default eps

_FOLDED_ORDER = ("ln1_g", "ln1_b", "wqkv", "bqkv", "wo", "bo",
                 "ln2_g", "ln2_b", "w1", "b1", "w2", "b2")


def _layernorm(h, gamma, beta):
    """LayerNorm with fused single-pass statistics (E[x], E[x^2])."""
    mu = jnp.mean(h, axis=-1, keepdims=True)
    m2 = jnp.mean(h * h, axis=-1, keepdims=True)
    var = jnp.maximum(m2 - mu * mu, 0.0)          # biased var (PyTorch LN)
    return (h - mu) * jax.lax.rsqrt(var + LN_EPS) * gamma + beta


# ----------------------------- kernel body ---------------------------------
def encoder_layer_kernel(
    x_ref,                       # (Bt, S, D)  io dtype
    ln1_g_ref, ln1_b_ref,        # (1, D)   f32
    wqkv_ref, bqkv_ref,          # (D, 3D), (1, 3D)  folded to_qkv ∘ attn.in_proj,
                                 #                   1/sqrt(dh) folded into Q cols
    wo_ref, bo_ref,              # (D, D),  (1, D)   folded attn.out_proj ∘ to_out
    ln2_g_ref, ln2_b_ref,        # (1, D)   f32
    w1_ref, b1_ref,              # (D, F),  (1, F)
    w2_ref, b2_ref,              # (F, D),  (1, D)
    o_ref,                       # (Bt, S, D)  io dtype
    *, n_heads: int, exact_softmax: bool,
):
    Bt, S, D = x_ref.shape
    dh = D // n_heads
    mm_dtype = wqkv_ref.dtype            # matmul operand dtype (f32 or bf16)

    x = x_ref[...].astype(jnp.float32)   # (Bt, S, D)
    xf = x.reshape(Bt * S, D)            # large-M slab for all projections

    # ---------------- self-attention sub-block ----------------
    h = _layernorm(xf, ln1_g_ref[...], ln1_b_ref[...])
    qkv = (jnp.dot(h.astype(mm_dtype), wqkv_ref[...],
                   preferred_element_type=jnp.float32) + bqkv_ref[...])
    qkv = qkv.reshape(Bt, S, 3 * D)      # softmax scale already folded into Q cols
    wo = wo_ref[...]

    # Per-head attention, batched over Bt with rank-3 einsums.  The output
    # projection is folded per head:  concat_h(o_h) @ Wo == Σ_h o_h @ Wo[h],
    # so there is no per-head masked store, no VMEM scratch, no concatenate.
    attn = jnp.zeros((Bt * S, D), jnp.float32)
    for hh in range(n_heads):
        lo = hh * dh
        qh = qkv[:, :, lo:lo + dh].astype(mm_dtype)
        kh = qkv[:, :, D + lo:D + lo + dh].astype(mm_dtype)
        vh = qkv[:, :, 2 * D + lo:2 * D + lo + dh].astype(mm_dtype)
        s = jnp.einsum("bqd,bkd->bqk", qh, kh,
                       preferred_element_type=jnp.float32)        # (Bt, S, S)
        s = s - jnp.max(s, axis=-1, keepdims=True)
        p = jnp.exp(s)
        denom = jnp.sum(p, axis=-1, keepdims=True)
        if exact_softmax:
            p = p / denom                                          # validation path
        else:
            p = p * pl.reciprocal(denom, approx=True)              # EUP slot
        oh = jnp.einsum("bqk,bkd->bqd", p.astype(mm_dtype), vh,
                        preferred_element_type=jnp.float32)        # (Bt, S, dh)
        attn = attn + jnp.dot(oh.reshape(Bt * S, dh).astype(mm_dtype),
                              wo[lo:lo + dh, :].astype(mm_dtype),
                              preferred_element_type=jnp.float32)

    x1 = xf + attn + bo_ref[...]          # dropout = identity (eval mode)

    # ---------------- feed-forward sub-block ----------------
    h2 = _layernorm(x1, ln2_g_ref[...], ln2_b_ref[...])
    f = (jnp.dot(h2.astype(mm_dtype), w1_ref[...],
                 preferred_element_type=jnp.float32) + b1_ref[...])
    f = jnp.maximum(f, 0.0)
    f = (jnp.dot(f.astype(mm_dtype), w2_ref[...],
                 preferred_element_type=jnp.float32) + b2_ref[...])

    o_ref[...] = (x1 + f).reshape(Bt, S, D).astype(o_ref.dtype)


# ----------------------------- sizing helpers --------------------------------
@functools.lru_cache(maxsize=1)
def _vmem_capacity_bytes() -> int:
    """Per-TensorCore VMEM capacity; conservative 64 MiB (v7x) fallback."""
    try:
        cap = int(pltpu.get_tpu_info().vmem_capacity_bytes)
        if cap > 0:
            return cap
    except Exception:
        pass
    return 64 << 20


@functools.lru_cache(maxsize=1)
def _weights_single_buffer_supported() -> bool:
    """Narrow one-time probe: does this jax accept pipeline_mode=pl.Buffered(1)?"""
    try:
        def k(x_ref, w_ref, o_ref):
            o_ref[...] = x_ref[...] + w_ref[...]

        f = pl.pallas_call(
            k,
            out_shape=jax.ShapeDtypeStruct((2, 8, 128), jnp.float32),
            grid_spec=pltpu.PrefetchScalarGridSpec(
                num_scalar_prefetch=0,
                grid=(2,),
                in_specs=[
                    pl.BlockSpec((1, 8, 128), lambda b: (b, 0, 0)),
                    pl.BlockSpec((8, 128), lambda b: (0, 0),
                                 pipeline_mode=pl.Buffered(1)),
                ],
                out_specs=pl.BlockSpec((1, 8, 128), lambda b: (b, 0, 0)),
            ),
        )
        x = jnp.zeros((2, 8, 128), jnp.float32)
        w = jnp.zeros((8, 128), jnp.float32)
        jax.block_until_ready(f(x, w))
        return True
    except Exception:
        # TODO(synk): fall back to memory_space=pl.ANY + one-time sync_copy to keep
        # weights single-copied even without Buffered(1).
        return False


def _pick_batch_tile(B, S, D, F, weight_bytes, io_itemsize, budget_bytes,
                     max_rows=2048):
    """Largest Bt dividing B that fits the VMEM budget; prefer >= 2 grid steps."""
    def est_bytes(bt):
        rows = bt * S
        io = 2 * 2 * rows * D * io_itemsize            # double-buffered in + out slabs
        acts = 4 * rows * (8 * D + 3 * D + F)          # f32 live intermediates (generous)
        scores = 2 * 4 * bt * S * S                    # one head's s + p in flight
        return io + acts + scores + 2 * weight_bytes

    divisors = [d for d in range(1, B + 1) if B % d == 0]
    fitting = [d for d in divisors
               if d * S <= max_rows and est_bytes(d) <= budget_bytes]
    bt = max(fitting) if fitting else 1
    # Guarantee nb >= 2 when B allows it (v7x has 2 TCs; also enables cross-step
    # input/output DMA pipelining on v5e/v6e).
    if bt == B and B >= 2:
        bt = max(d for d in divisors if d < B)
    return bt


def _weight_block_shapes(D, F):
    # Must match _FOLDED_ORDER.
    return ((1, D), (1, D), (D, 3 * D), (1, 3 * D), (D, D), (1, D),
            (1, D), (1, D), (D, F), (1, F), (F, D), (1, D))


@functools.lru_cache(maxsize=None)
def _build_layer_call(B, S, D, F, Bt, n_heads, io_dtype, single_buffer,
                      vmem_limit, exact_softmax):
    nb = B // Bt

    def w_spec(shape):
        # Weights never change across the batch grid -> single-buffer if possible.
        if single_buffer:
            return pl.BlockSpec(shape, lambda b: (0, 0),
                                pipeline_mode=pl.Buffered(1))
        return pl.BlockSpec(shape, lambda b: (0, 0))

    in_specs = [pl.BlockSpec((Bt, S, D), lambda b: (b, 0, 0))]
    in_specs += [w_spec(s) for s in _weight_block_shapes(D, F)]
    out_spec = pl.BlockSpec((Bt, S, D), lambda b: (b, 0, 0))

    kernel = functools.partial(encoder_layer_kernel, n_heads=n_heads,
                               exact_softmax=exact_softmax)
    return pl.pallas_call(
        kernel,
        out_shape=jax.ShapeDtypeStruct((B, S, D), io_dtype),
        grid_spec=pltpu.PrefetchScalarGridSpec(
            num_scalar_prefetch=0,
            grid=(nb,),
            in_specs=in_specs,
            out_specs=out_spec,
        ),
        compiler_params=pltpu.CompilerParams(
            dimension_semantics=("parallel",),   # batch tiles are independent
            vmem_limit_bytes=int(vmem_limit),
        ),
    )


def encoder_layer_forward(x_bsd, folded, n_heads, *, exact_softmax=False):
    """One encoder layer.  x_bsd: (B, S, D)."""
    B, S, D = x_bsd.shape
    F = folded["w1"].shape[1]
    weights = [folded[k] for k in _FOLDED_ORDER]
    weight_bytes = sum(int(w.size) * w.dtype.itemsize for w in weights)

    cap = _vmem_capacity_bytes()
    budget = int(cap * 0.70)
    vmem_limit = max(32 << 20, min(int(cap * 0.85), cap - (8 << 20)))
    Bt = _pick_batch_tile(B, S, D, F, weight_bytes,
                          jnp.dtype(x_bsd.dtype).itemsize, budget)

    call = _build_layer_call(B, S, D, F, Bt, n_heads, jnp.dtype(x_bsd.dtype),
                             _weights_single_buffer_supported(), vmem_limit,
                             exact_softmax)
    return call(x_bsd, *weights)


# ------------------------------- module --------------------------------------
class Encoder:
    """Pallas-backed transformer Encoder (stack of EncoderLayers), eval mode."""

    def __init__(self, n_layers, d_model, n_heads, d_ff, dropout_rate=0.1,
                 key=None, param_dtype=jnp.float32, io_dtype=None,
                 exact_softmax=False):
        # param_dtype=jnp.bfloat16 (and bf16 activation I/O) is recommended for
        # v6e/v7x; f32 accumulation is kept inside the kernel either way.
        assert d_model % n_heads == 0
        self.n_layers = n_layers
        self.d_model = d_model
        self.n_heads = n_heads
        self.d_ff = d_ff
        self.exact_softmax = exact_softmax
        self.io_dtype = jnp.dtype(param_dtype if io_dtype is None else io_dtype)
        if key is None:
            key = jax.random.PRNGKey(0)

        def w(kk, shape, scale=0.02):
            return (scale * jax.random.normal(kk, shape)).astype(jnp.float32)

        D, F = d_model, d_ff
        self.layer_params = []      # raw (unfolded) params, used by the reference
        for i in range(n_layers):
            ks = jax.random.split(jax.random.fold_in(key, i), 12)
            p = dict(
                ln1_g=jnp.ones((1, D), jnp.float32),
                ln1_b=jnp.zeros((1, D), jnp.float32),
                # all Linear weights stored as (in, out) == PyTorch weight.T
                wqkv=w(ks[0], (D, 3 * D)), bqkv=w(ks[1], (1, 3 * D)),
                win=w(ks[2], (D, 3 * D)), bin=w(ks[3], (1, 3 * D)),
                wout=w(ks[4], (D, D)), bout=w(ks[5], (1, D)),
                wto=w(ks[6], (D, D)), bto=w(ks[7], (1, D)),
                ln2_g=jnp.ones((1, D), jnp.float32),
                ln2_b=jnp.zeros((1, D), jnp.float32),
                w1=w(ks[8], (D, F)), b1=w(ks[9], (1, F)),
                w2=w(ks[10], (F, D)), b2=w(ks[11], (1, D)),
            )
            self.layer_params.append(p)
        # folded params consumed by the Pallas kernel
        self.folded_params = [self._fold(p, n_heads, param_dtype)
                              for p in self.layer_params]

    @staticmethod
    def _fold(p, n_heads, param_dtype):
        """Fold to_qkv ∘ attn.in_proj, attn.out_proj ∘ to_out, and the softmax
        scale (into the Q columns) offline."""
        D = p["wqkv"].shape[0]
        dh = D // n_heads
        scale = 1.0 / math.sqrt(dh)
        cols = [slice(0, D), slice(D, 2 * D), slice(2 * D, 3 * D)]
        w_parts, b_parts = [], []
        for idx, c in enumerate(cols):
            wc = p["wqkv"][:, c] @ p["win"][:, c]
            bc = p["bqkv"][:, c] @ p["win"][:, c] + p["bin"][:, c]
            if idx == 0:                       # Q columns carry the 1/sqrt(dh)
                wc = wc * scale
                bc = bc * scale
            w_parts.append(wc)
            b_parts.append(bc)
        wqkv_f = jnp.concatenate(w_parts, axis=1)
        bqkv_f = jnp.concatenate(b_parts, axis=1)
        wo_f = p["wout"] @ p["wto"]
        bo_f = p["bout"] @ p["wto"] + p["bto"]
        return dict(
            ln1_g=p["ln1_g"], ln1_b=p["ln1_b"],
            wqkv=wqkv_f.astype(param_dtype), bqkv=bqkv_f.astype(jnp.float32),
            wo=wo_f.astype(param_dtype), bo=bo_f.astype(jnp.float32),
            ln2_g=p["ln2_g"], ln2_b=p["ln2_b"],
            w1=p["w1"].astype(param_dtype), b1=p["b1"].astype(jnp.float32),
            w2=p["w2"].astype(param_dtype), b2=p["b2"].astype(jnp.float32),
        )

    def __call__(self, x_sbd, attn_mask=None, pad_mask=None):
        # x_sbd: (S, B, D) like the PyTorch module (batch_first=False).
        assert attn_mask is None and pad_mask is None  # TODO(synk): masks not implemented
        x = jnp.transpose(x_sbd, (1, 0, 2)).astype(self.io_dtype)
        # TODO(synk): cross-call prefetch of the next layer's weights (P10).
        for fp in self.folded_params:
            x = encoder_layer_forward(x, fp, self.n_heads,
                                      exact_softmax=self.exact_softmax)
        return jnp.transpose(x, (1, 0, 2))


# ------------------------- pure-JAX reference (unfolded weights) -------------
def _ref_layer(x, p, n_heads):
    D = x.shape[-1]
    dh = D // n_heads

    def ln(h, g, b):
        mu = h.mean(-1, keepdims=True)
        var = ((h - mu) ** 2).mean(-1, keepdims=True)
        return (h - mu) / jnp.sqrt(var + LN_EPS) * g + b

    h = ln(x, p["ln1_g"], p["ln1_b"])
    qkv = h @ p["wqkv"] + p["bqkv"]
    q, k, v = jnp.split(qkv, 3, axis=-1)
    q = q @ p["win"][:, :D] + p["bin"][:, :D]
    k = k @ p["win"][:, D:2 * D] + p["bin"][:, D:2 * D]
    v = v @ p["win"][:, 2 * D:] + p["bin"][:, 2 * D:]
    B, S, _ = x.shape
    qh = q.reshape(B, S, n_heads, dh).transpose(0, 2, 1, 3)
    kh = k.reshape(B, S, n_heads, dh).transpose(0, 2, 1, 3)
    vh = v.reshape(B, S, n_heads, dh).transpose(0, 2, 1, 3)
    s = (qh / math.sqrt(dh)) @ kh.transpose(0, 1, 3, 2)
    a = jax.nn.softmax(s, axis=-1)
    o = (a @ vh).transpose(0, 2, 1, 3).reshape(B, S, D)
    o = o @ p["wout"] + p["bout"]
    o = o @ p["wto"] + p["bto"]
    x1 = x + o
    h2 = ln(x1, p["ln2_g"], p["ln2_b"])
    f = jnp.maximum(h2 @ p["w1"] + p["b1"], 0.0) @ p["w2"] + p["b2"]
    return x1 + f


if __name__ == "__main__":
    n_layers, d_model, n_heads, d_ff = 2, 32, 4, 64
    S, B = 8, 2

    key = jax.random.PRNGKey(0)
    x = jax.random.normal(jax.random.fold_in(key, 999), (S, B, d_model),
                          dtype=jnp.float32)

    # f32 params + exact-reciprocal softmax: validation path vs pure-JAX reference.
    enc = Encoder(n_layers, d_model, n_heads, d_ff, key=key,
                  param_dtype=jnp.float32, exact_softmax=True)
    out = jax.block_until_ready(enc(x))
    assert out.shape == (S, B, d_model)

    xr = jnp.transpose(x, (1, 0, 2))
    for p in enc.layer_params:
        xr = _ref_layer(xr, p, n_heads)
    ref = jnp.transpose(xr, (1, 0, 2))
    err = float(jnp.max(jnp.abs(out - ref)))
    assert jnp.all(jnp.isfinite(out)), "non-finite output"
    assert jnp.allclose(out, ref, atol=1e-3, rtol=1e-3), f"max abs err {err}"

    # bf16 weights + bf16 activation I/O + approx-reciprocal softmax: the
    # recommended fast path on v6e/v7x (f32 accumulation kept in the kernel).
    enc_bf16 = Encoder(n_layers, d_model, n_heads, d_ff, key=key,
                       param_dtype=jnp.bfloat16)
    out_bf16 = jax.block_until_ready(enc_bf16(x))
    assert out_bf16.shape == (S, B, d_model)
    assert jnp.all(jnp.isfinite(out_bf16.astype(jnp.float32))), "non-finite bf16 output"

    print("KERNEL_OK")
</pallas_src>

<mosaic_0001>
module attributes {stable_mosaic.version = 11 : i64} {
  func.func @k(%arg0: i32, %arg1: memref<1x8x128xf32, #tpu.memory_space<vmem>>, %arg2: memref<8x128xf32, #tpu.memory_space<vmem>>, %arg3: memref<1x8x128xf32, #tpu.memory_space<vmem>>) attributes {dimension_semantics = [#tpu.dimension_semantics<arbitrary>], iteration_bounds = array<i64: 2>, scalar_prefetch = 0 : i64, scratch_operands = 0 : i64, tpu.core_type = #tpu.core_type<tc>, window_params = [{transform_indices = @transform_0, window_bounds = array<i64: 1, 8, 128>}, {pipeline_mode = #tpu.pipeline_mode<synchronous>, transform_indices = @transform_1, window_bounds = array<i64: 8, 128>}, {transform_indices = @transform_2, window_bounds = array<i64: 1, 8, 128>}]} {
    %c0 = arith.constant 0 : index
    %c0_0 = arith.constant 0 : index
    %c0_1 = arith.constant 0 : index
    %0 = vector.load %arg1[%c0, %c0_0, %c0_1] : memref<1x8x128xf32, #tpu.memory_space<vmem>>, vector<1x8x128xf32>
    %c0_2 = arith.constant 0 : index
    %c0_3 = arith.constant 0 : index
    %1 = vector.load %arg2[%c0_2, %c0_3] : memref<8x128xf32, #tpu.memory_space<vmem>>, vector<8x128xf32>
    %2 = vector.shape_cast %1 : vector<8x128xf32> to vector<1x8x128xf32>
    %3 = arith.addf %0, %2 : vector<1x8x128xf32>
    %c0_4 = arith.constant 0 : index
    %c0_5 = arith.constant 0 : index
    %c0_6 = arith.constant 0 : index
    %4 = vector.load %arg3[%c0_4, %c0_5, %c0_6] : memref<1x8x128xf32, #tpu.memory_space<vmem>>, vector<1x8x128xf32>
    tpu.vector_store %arg3[%c0_4, %c0_5, %c0_6], %3 {strides = array<i32>} : memref<1x8x128xf32, #tpu.memory_space<vmem>>, vector<1x8x128xf32>,
    return
  }
  func.func @transform_0(%arg0: i32) -> (i32, i32, i32) {
    %c0_i32 = arith.constant 0 : i32
    %c0_i32_0 = arith.constant 0 : i32
    %c0_i32_1 = arith.constant 0 : i32
    return %arg0, %c0_i32, %c0_i32_0 : i32, i32, i32
  }
  func.func @transform_1(%arg0: i32) -> (i32, i32) {
    %c0_i32 = arith.constant 0 : i32
    %c0_i32_0 = arith.constant 0 : i32
    %c0_i32_1 = arith.constant 0 : i32
    return %c0_i32, %c0_i32_0 : i32, i32
  }
  func.func @transform_2(%arg0: i32) -> (i32, i32, i32) {
    %c0_i32 = arith.constant 0 : i32
    %c0_i32_0 = arith.constant 0 : i32
    %c0_i32_1 = arith.constant 0 : i32
    return %arg0, %c0_i32, %c0_i32_0 : i32, i32, i32
  }
}

module attributes {stable_mosaic.version = 11 : i64} {
  func.func @encoder_layer_kernel(%arg0: i32, %arg1: memref<1x8x32xf32, #tpu.memory_space<vmem>>, %arg2: memref<1x32xf32, #tpu.memory_space<vmem>>, %arg3: memref<1x32xf32, #tpu.memory_space<vmem>>, %arg4: memref<32x96xf32, #tpu.memory_space<vmem>>, %arg5: memref<1x96xf32, #tpu.memory_space<vmem>>, %arg6: memref<32x32xf32, #tpu.memory_space<vmem>>, %arg7: memref<1x32xf32, #tpu.memory_space<vmem>>, %arg8: memref<1x32xf32, #tpu.memory_space<vmem>>, %arg9: memref<1x32xf32, #tpu.memory_space<vmem>>, %arg10: memref<32x64xf32, #tpu.memory_space<vmem>>, %arg11: memref<1x64xf32, #tpu.memory_space<vmem>>, %arg12: memref<64x32xf32, #tpu.memory_space<vmem>>, %arg13: memref<1x32xf32, #tpu.memory_space<vmem>>, %arg14: memref<1x8x32xf32, #tpu.memory_space<vmem>>) attributes {dimension_semantics = [#tpu.dimension_semantics<parallel>], iteration_bounds = array<i64: 2>, scalar_prefetch = 0 : i64, scratch_operands = 0 : i64, tpu.core_type = #tpu.core_type<tc>, window_params = [{transform_indices = @transform_0, window_bounds = array<i64: 1, 8, 32>}, {pipeline_mode = #tpu.pipeline_mode<synchronous>, transform_indices = @transform_1, window_bounds = array<i64: 1, 32>}, {pipeline_mode = #tpu.pipeline_mode<synchronous>, transform_indices = @transform_2, window_bounds = array<i64: 1, 32>}, {pipeline_mode = #tpu.pipeline_mode<synchronous>, transform_indices = @transform_3, window_bounds = array<i64: 32, 96>}, {pipeline_mode = #tpu.pipeline_mode<synchronous>, transform_indices = @transform_4, window_bounds = array<i64: 1, 96>}, {pipeline_mode = #tpu.pipeline_mode<synchronous>, transform_indices = @transform_5, window_bounds = array<i64: 32, 32>}, {pipeline_mode = #tpu.pipeline_mode<synchronous>, transform_indices = @transform_6, window_bounds = array<i64: 1, 32>}, {pipeline_mode = #tpu.pipeline_mode<synchronous>, transform_indices = @transform_7, window_bounds = array<i64: 1, 32>}, {pipeline_mode = #tpu.pipeline_mode<synchronous>, transform_indices = @transform_8, window_bounds = array<i64: 1, 32>}, {pipeline_mode = #tpu.pipeline_mode<synchronous>, transform_indices = @transform_9, window_bounds = array<i64: 32, 64>}, {pipeline_mode = #tpu.pipeline_mode<synchronous>, transform_indices = @transform_10, window_bounds = array<i64: 1, 64>}, {pipeline_mode = #tpu.pipeline_mode<synchronous>, transform_indices = @transform_11, window_bounds = array<i64: 64, 32>}, {pipeline_mode = #tpu.pipeline_mode<synchronous>, transform_indices = @transform_12, window_bounds = array<i64: 1, 32>}, {transform_indices = @transform_13, window_bounds = array<i64: 1, 8, 32>}]} {
    %c0 = arith.constant 0 : index
    %c0_0 = arith.constant 0 : index
    %c0_1 = arith.constant 0 : index
    %0 = vector.load %arg1[%c0, %c0_0, %c0_1] : memref<1x8x32xf32, #tpu.memory_space<vmem>>, vector<1x8x32xf32>
    %1 = vector.shape_cast %0 : vector<1x8x32xf32> to vector<8x32xf32>
    %c0_2 = arith.constant 0 : index
    %c0_3 = arith.constant 0 : index
    %2 = vector.load %arg2[%c0_2, %c0_3] : memref<1x32xf32, #tpu.memory_space<vmem>>, vector<1x32xf32>
    %c0_4 = arith.constant 0 : index
    %c0_5 = arith.constant 0 : index
    %3 = vector.load %arg3[%c0_4, %c0_5] : memref<1x32xf32, #tpu.memory_space<vmem>>, vector<1x32xf32>
    %cst = arith.constant dense<0.000000e+00> : vector<8xf32>
    %4 = vector.multi_reduction <add>, %1, %cst [1] : vector<8x32xf32> to vector<8xf32>
    %5 = vector.shape_cast %4 : vector<8xf32> to vector<8x1xf32>
    %cst_6 = arith.constant 3.200000e+01 : f32
    %6 = vector.broadcast %cst_6 : f32 to vector<8x1xf32>
    %7 = arith.divf %5, %6 : vector<8x1xf32>
    %8 = arith.mulf %1, %1 : vector<8x32xf32>
    %cst_7 = arith.constant dense<0.000000e+00> : vector<8xf32>
    %9 = vector.multi_reduction <add>, %8, %cst_7 [1] : vector<8x32xf32> to vector<8xf32>
    %10 = vector.shape_cast %9 : vector<8xf32> to vector<8x1xf32>
    %cst_8 = arith.constant 3.200000e+01 : f32
    %11 = vector.broadcast %cst_8 : f32 to vector<8x1xf32>
    %12 = arith.divf %10, %11 : vector<8x1xf32>
    %13 = arith.mulf %7, %7 : vector<8x1xf32>
    %14 = arith.subf %12, %13 : vector<8x1xf32>
    %cst_9 = arith.constant 0.000000e+00 : f32
    %15 = vector.broadcast %cst_9 : f32 to vector<8x1xf32>
    %16 = arith.maximumf %14, %15 : vector<8x1xf32>
    %17 = vector.broadcast %7 : vector<8x1xf32> to vector<8x32xf32>
    %18 = arith.subf %1, %17 : vector<8x32xf32>
    %cst_10 = arith.constant 9.99999974E-6 : f32
    %19 = vector.broadcast %cst_10 : f32 to vector<8x1xf32>
    %20 = arith.addf %16, %19 : vector<8x1xf32>
    %21 = math.rsqrt %20 : vector<8x1xf32>
    %22 = vector.broadcast %21 : vector<8x1xf32> to vector<8x32xf32>
    %23 = arith.mulf %18, %22 : vector<8x32xf32>
    %24 = vector.broadcast %2 : vector<1x32xf32> to vector<8x32xf32>
    %25 = arith.mulf %23, %24 : vector<8x32xf32>
    %26 = vector.broadcast %3 : vector<1x32xf32> to vector<8x32xf32>
    %27 = arith.addf %25, %26 : vector<8x32xf32>
    %c0_11 = arith.constant 0 : index
    %c0_12 = arith.constant 0 : index
    %28 = vector.load %arg4[%c0_11, %c0_12] : memref<32x96xf32, #tpu.memory_space<vmem>>, vector<32x96xf32>
    %cst_13 = arith.constant dense<0.000000e+00> : vector<8x96xf32>
    %29 = tpu.matmul %27, %28, %cst_13 {dimension_numbers = #tpu.dot_dimension_numbers<[1], [0], [0], [1], [0, 0, 1, 1], [], []>} : vector<8x32xf32>, vector<32x96xf32>, vector<8x96xf32> -> vector<8x96xf32>
    %c0_14 = arith.constant 0 : index
    %c0_15 = arith.constant 0 : index
    %30 = vector.load %arg5[%c0_14, %c0_15] : memref<1x96xf32, #tpu.memory_space<vmem>>, vector<1x96xf32>
    %31 = vector.broadcast %30 : vector<1x96xf32> to vector<8x96xf32>
    %32 = arith.addf %29, %31 : vector<8x96xf32>
    %33 = vector.shape_cast %32 : vector<8x96xf32> to vector<1x8x96xf32>
    %c0_16 = arith.constant 0 : index
    %c0_17 = arith.constant 0 : index
    %34 = vector.load %arg6[%c0_16, %c0_17] : memref<32x32xf32, #tpu.memory_space<vmem>>, vector<32x32xf32>
    %cst_18 = arith.constant 0.000000e+00 : f32
    %35 = vector.broadcast %cst_18 : f32 to vector<8x32xf32>
    %36 = vector.extract_strided_slice %33 {offsets = [0, 0, 0], sizes = [1, 8, 8], strides = [1, 1, 1]} : vector<1x8x96xf32> to vector<1x8x8xf32>
    %37 = vector.extract_strided_slice %33 {offsets = [0, 0, 32], sizes = [1, 8, 8], strides = [1, 1, 1]} : vector<1x8x96xf32> to vector<1x8x8xf32>
    %38 = vector.extract_strided_slice %33 {offsets = [0, 0, 64], sizes = [1, 8, 8], strides = [1, 1, 1]} : vector<1x8x96xf32> to vector<1x8x8xf32>
    "tpu.trace_start"() <{level = 10 : i32, message = "bqd,bkd->bqk"}> : () -> ()
    %cst_19 = arith.constant dense<0.000000e+00> : vector<1x8x8xf32>
    %39 = tpu.matmul %36, %37, %cst_19 {dimension_numbers = #tpu.dot_dimension_numbers<[2], [2], [1], [1], [0, 0, 0, 1, 1, 1], [0], [0]>} : vector<1x8x8xf32>, vector<1x8x8xf32>, vector<1x8x8xf32> -> vector<1x8x8xf32>
    "tpu.trace_stop"() : () -> ()
    %cst_20 = arith.constant dense<0xFF800000> : vector<1x8xf32>
    %40 = vector.multi_reduction <maximumf>, %39, %cst_20 [2] : vector<1x8x8xf32> to vector<1x8xf32>
    %41 = vector.shape_cast %40 : vector<1x8xf32> to vector<1x8x1xf32>
    %42 = vector.broadcast %41 : vector<1x8x1xf32> to vector<1x8x8xf32>
    %43 = arith.subf %39, %42 : vector<1x8x8xf32>
    %44 = math.exp %43 : vector<1x8x8xf32>
    %cst_21 = arith.constant dense<0.000000e+00> : vector<1x8xf32>
    %45 = vector.multi_reduction <add>, %44, %cst_21 [2] : vector<1x8x8xf32> to vector<1x8xf32>
    %46 = vector.shape_cast %45 : vector<1x8xf32> to vector<1x8x1xf32>
    %47 = vector.broadcast %46 : vector<1x8x1xf32> to vector<1x8x8xf32>
    %48 = arith.divf %44, %47 : vector<1x8x8xf32>
    "tpu.trace_start"() <{level = 10 : i32, message = "bqk,bkd->bqd"}> : () -> ()
    %cst_22 = arith.constant dense<0.000000e+00> : vector<1x8x8xf32>
    %49 = tpu.matmul %48, %38, %cst_22 {dimension_numbers = #tpu.dot_dimension_numbers<[2], [1], [1], [2], [0, 0, 0, 1, 1, 2], [0], [0]>} : vector<1x8x8xf32>, vector<1x8x8xf32>, vector<1x8x8xf32> -> vector<1x8x8xf32>
    "tpu.trace_stop"() : () -> ()
    %50 = vector.shape_cast %49 : vector<1x8x8xf32> to vector<8x8xf32>
    %51 = vector.extract_strided_slice %34 {offsets = [0, 0], sizes = [8, 32], strides = [1, 1]} : vector<32x32xf32> to vector<8x32xf32>
    %cst_23 = arith.constant dense<0.000000e+00> : vector<8x32xf32>
    %52 = tpu.matmul %50, %51, %cst_23 {dimension_numbers = #tpu.dot_dimension_numbers<[1], [0], [0], [1], [0, 0, 1, 1], [], []>} : vector<8x8xf32>, vector<8x32xf32>, vector<8x32xf32> -> vector<8x32xf32>
    %53 = arith.addf %35, %52 : vector<8x32xf32>
    %54 = vector.extract_strided_slice %33 {offsets = [0, 0, 8], sizes = [1, 8, 8], strides = [1, 1, 1]} : vector<1x8x96xf32> to vector<1x8x8xf32>
    %55 = vector.extract_strided_slice %33 {offsets = [0, 0, 40], sizes = [1, 8, 8], strides = [1, 1, 1]} : vector<1x8x96xf32> to vector<1x8x8xf32>
    %56 = vector.extract_strided_slice %33 {offsets = [0, 0, 72], sizes = [1, 8, 8], strides = [1, 1, 1]} : vector<1x8x96xf32> to vector<1x8x8xf32>
    "tpu.trace_start"() <{level = 10 : i32, message = "bqd,bkd->bqk"}> : () -> ()
    %cst_24 = arith.constant dense<0.000000e+00> : vector<1x8x8xf32>
    %57 = tpu.matmul %54, %55, %cst_24 {dimension_numbers = #tpu.dot_dimension_numbers<[2], [2], [1], [1], [0, 0, 0, 1, 1, 1], [0], [0]>} : vector<1x8x8xf32>, vector<1x8x8xf32>, vector<1x8x8xf32> -> vector<1x8x8xf32>
    "tpu.trace_stop"() : () -> ()
    %cst_25 = arith.constant dense<0xFF800000> : vector<1x8xf32>
    %58 = vector.multi_reduction <maximumf>, %57, %cst_25 [2] : vector<1x8x8xf32> to vector<1x8xf32>
    %59 = vector.shape_cast %58 : vector<1x8xf32> to vector<1x8x1xf32>
    %60 = vector.broadcast %59 : vector<1x8x1xf32> to vector<1x8x8xf32>
    %61 = arith.subf %57, %60 : vector<1x8x8xf32>
    %62 = math.exp %61 : vector<1x8x8xf32>
    %cst_26 = arith.constant dense<0.000000e+00> : vector<1x8xf32>
    %63 = vector.multi_reduction <add>, %62, %cst_26 [2] : vector<1x8x8xf32> to vector<1x8xf32>
    %64 = vector.shape_cast %63 : vector<1x8xf32> to vector<1x8x1xf32>
    %65 = vector.broadcast %64 : vector<1x8x1xf32> to vector<1x8x8xf32>
    %66 = arith.divf %62, %65 : vector<1x8x8xf32>
    "tpu.trace_start"() <{level = 10 : i32, message = "bqk,bkd->bqd"}> : () -> ()
    %cst_27 = arith.constant dense<0.000000e+00> : vector<1x8x8xf32>
    %67 = tpu.matmul %66, %56, %cst_27 {dimension_numbers = #tpu.dot_dimension_numbers<[2], [1], [1], [2], [0, 0, 0, 1, 1, 2], [0], [0]>} : vector<1x8x8xf32>, vector<1x8x8xf32>, vector<1x8x8xf32> -> vector<1x8x8xf32>
    "tpu.trace_stop"() : () -> ()
    %68 = vector.shape_cast %67 : vector<1x8x8xf32> to vector<8x8xf32>
    %69 = vector.extract_strided_slice %34 {offsets = [8, 0], sizes = [8, 32], strides = [1, 1]} : vector<32x32xf32> to vector<8x32xf32>
    %cst_28 = arith.constant dense<0.000000e+00> : vector<8x32xf32>
    %70 = tpu.matmul %68, %69, %cst_28 {dimension_numbers = #tpu.dot_dimension_numbers<[1], [0], [0], [1], [0, 0, 1, 1], [], []>} : vector<8x8xf32>, vector<8x32xf32>, vector<8x32xf32> -> vector<8x32xf32>
    %71 = arith.addf %53, %70 : vector<8x32xf32>
    %72 = vector.extract_strided_slice %33 {offsets = [0, 0, 16], sizes = [1, 8, 8], strides = [1, 1, 1]} : vector<1x8x96xf32> to vector<1x8x8xf32>
    %73 = vector.extract_strided_slice %33 {offsets = [0, 0, 48], sizes = [1, 8, 8], strides = [1, 1, 1]} : vector<1x8x96xf32> to vector<1x8x8xf32>
    %74 = vector.extract_strided_slice %33 {offsets = [0, 0, 80], sizes = [1, 8, 8], strides = [1, 1, 1]} : vector<1x8x96xf32> to vector<1x8x8xf32>
    "tpu.trace_start"() <{level = 10 : i32, message = "bqd,bkd->bqk"}> : () -> ()
    %cst_29 = arith.constant dense<0.000000e+00> : vector<1x8x8xf32>
    %75 = tpu.matmul %72, %73, %cst_29 {dimension_numbers = #tpu.dot_dimension_numbers<[2], [2], [1], [1], [0, 0, 0, 1, 1, 1], [0], [0]>} : vector<1x8x8xf32>, vector<1x8x8xf32>, vector<1x8x8xf32> -> vector<1x8x8xf32>
    "tpu.trace_stop"() : () -> ()
    %cst_30 = arith.constant dense<0xFF800000> : vector<1x8xf32>
    %76 = vector.multi_reduction <maximumf>, %75, %cst_30 [2] : vector<1x8x8xf32> to vector<1x8xf32>
    %77 = vector.shape_cast %76 : vector<1x8xf32> to vector<1x8x1xf32>
    %78 = vector.broadcast %77 : vector<1x8x1xf32> to vector<1x8x8xf32>
    %79 = arith.subf %75, %78 : vector<1x8x8xf32>
    %80 = math.exp %79 : vector<1x8x8xf32>
    %cst_31 = arith.constant dense<0.000000e+00> : vector<1x8xf32>
    %81 = vector.multi_reduction <add>, %80, %cst_31 [2] : vector<1x8x8xf32> to vector<1x8xf32>
    %82 = vector.shape_cast %81 : vector<1x8xf32> to vector<1x8x1xf32>
    %83 = vector.broadcast %82 : vector<1x8x1xf32> to vector<1x8x8xf32>
    %84 = arith.divf %80, %83 : vector<1x8x8xf32>
    "tpu.trace_start"() <{level = 10 : i32, message = "bqk,bkd->bqd"}> : () -> ()
    %cst_32 = arith.constant dense<0.000000e+00> : vector<1x8x8xf32>
    %85 = tpu.matmul %84, %74, %cst_32 {dimension_numbers = #tpu.dot_dimension_numbers<[2], [1], [1], [2], [0, 0, 0, 1, 1, 2], [0], [0]>} : vector<1x8x8xf32>, vector<1x8x8xf32>, vector<1x8x8xf32> -> vector<1x8x8xf32>
    "tpu.trace_stop"() : () -> ()
    %86 = vector.shape_cast %85 : vector<1x8x8xf32> to vector<8x8xf32>
    %87 = vector.extract_strided_slice %34 {offsets = [16, 0], sizes = [8, 32], strides = [1, 1]} : vector<32x32xf32> to vector<8x32xf32>
    %cst_33 = arith.constant dense<0.000000e+00> : vector<8x32xf32>
    %88 = tpu.matmul %86, %87, %cst_33 {dimension_numbers = #tpu.dot_dimension_numbers<[1], [0], [0], [1], [0, 0, 1, 1], [], []>} : vector<8x8xf32>, vector<8x32xf32>, vector<8x32xf32> -> vector<8x32xf32>
    %89 = arith.addf %71, %88 : vector<8x32xf32>
    %90 = vector.extract_strided_slice %33 {offsets = [0, 0, 24], sizes = [1, 8, 8], strides = [1, 1, 1]} : vector<1x8x96xf32> to vector<1x8x8xf32>
    %91 = vector.extract_strided_slice %33 {offsets = [0, 0, 56], sizes = [1, 8, 8], strides = [1, 1, 1]} : vector<1x8x96xf32> to vector<1x8x8xf32>
    %92 = vector.extract_strided_slice %33 {offsets = [0, 0, 88], sizes = [1, 8, 8], strides = [1, 1, 1]} : vector<1x8x96xf32> to vector<1x8x8xf32>
    "tpu.trace_start"() <{level = 10 : i32, message = "bqd,bkd->bqk"}> : () -> ()
    %cst_34 = arith.constant dense<0.000000e+00> : vector<1x8x8xf32>
    %93 = tpu.matmul %90, %91, %cst_34 {dimension_numbers = #tpu.dot_dimension_numbers<[2], [2], [1], [1], [0, 0, 0, 1, 1, 1], [0], [0]>} : vector<1x8x8xf32>, vector<1x8x8xf32>, vector<1x8x8xf32> -> vector<1x8x8xf32>
    "tpu.trace_stop"() : () -> ()
    %cst_35 = arith.constant dense<0xFF800000> : vector<1x8xf32>
    %94 = vector.multi_reduction <maximumf>, %93, %cst_35 [2] : vector<1x8x8xf32> to vector<1x8xf32>
    %95 = vector.shape_cast %94 : vector<1x8xf32> to vector<1x8x1xf32>
    %96 = vector.broadcast %95 : vector<1x8x1xf32> to vector<1x8x8xf32>
    %97 = arith.subf %93, %96 : vector<1x8x8xf32>
    %98 = math.exp %97 : vector<1x8x8xf32>
    %cst_36 = arith.constant dense<0.000000e+00> : vector<1x8xf32>
    %99 = vector.multi_reduction <add>, %98, %cst_36 [2] : vector<1x8x8xf32> to vector<1x8xf32>
    %100 = vector.shape_cast %99 : vector<1x8xf32> to vector<1x8x1xf32>
    %101 = vector.broadcast %100 : vector<1x8x1xf32> to vector<1x8x8xf32>
    %102 = arith.divf %98, %101 : vector<1x8x8xf32>
    "tpu.trace_start"() <{level = 10 : i32, message = "bqk,bkd->bqd"}> : () -> ()
    %cst_37 = arith.constant dense<0.000000e+00> : vector<1x8x8xf32>
    %103 = tpu.matmul %102, %92, %cst_37 {dimension_numbers = #tpu.dot_dimension_numbers<[2], [1], [1], [2], [0, 0, 0, 1, 1, 2], [0], [0]>} : vector<1x8x8xf32>, vector<1x8x8xf32>, vector<1x8x8xf32> -> vector<1x8x8xf32>
    "tpu.trace_stop"() : () -> ()
    %104 = vector.shape_cast %103 : vector<1x8x8xf32> to vector<8x8xf32>
    %105 = vector.extract_strided_slice %34 {offsets = [24, 0], sizes = [8, 32], strides = [1, 1]} : vector<32x32xf32> to vector<8x32xf32>
    %cst_38 = arith.constant dense<0.000000e+00> : vector<8x32xf32>
    %106 = tpu.matmul %104, %105, %cst_38 {dimension_numbers = #tpu.dot_dimension_numbers<[1], [0], [0], [1], [0, 0, 1, 1], [], []>} : vector<8x8xf32>, vector<8x32xf32>, vector<8x32xf32> -> vector<8x32xf32>
    %107 = arith.addf %89, %106 : vector<8x32xf32>
    %108 = arith.addf %1, %107 : vector<8x32xf32>
    %c0_39 = arith.constant 0 : index
    %c0_40 = arith.constant 0 : index
    %109 = vector.load %arg7[%c0_39, %c0_40] : memref<1x32xf32, #tpu.memory_space<vmem>>, vector<1x32xf32>
    %110 = vector.broadcast %109 : vector<1x32xf32> to vector<8x32xf32>
    %111 = arith.addf %108, %110 : vector<8x32xf32>
    %c0_41 = arith.constant 0 : index
    %c0_42 = arith.constant 0 : index
    %112 = vector.load %arg8[%c0_41, %c0_42] : memref<1x32xf32, #tpu.memory_space<vmem>>, vector<1x32xf32>
    %c0_43 = arith.constant 0 : index
    %c0_44 = arith.constant 0 : index
    %113 = vector.load %arg9[%c0_43, %c0_44] : memref<1x32xf32, #tpu.memory_space<vmem>>, vector<1x32xf32>
    %cst_45 = arith.constant dense<0.000000e+00> : vector<8xf32>
    %114 = vector.multi_reduction <add>, %111, %cst_45 [1] : vector<8x32xf32> to vector<8xf32>
    %115 = vector.shape_cast %114 : vector<8xf32> to vector<8x1xf32>
    %cst_46 = arith.constant 3.200000e+01 : f32
    %116 = vector.broadcast %cst_46 : f32 to vector<8x1xf32>
    %117 = arith.divf %115, %116 : vector<8x1xf32>
    %118 = arith.mulf %111, %111 : vector<8x32xf32>
    %cst_47 = arith.constant dense<0.000000e+00> : vector<8xf32>
    %119 = vector.multi_reduction <add>, %118, %cst_47 [1] : vector<8x32xf32> to vector<8xf32>
    %120 = vector.shape_cast %119 : vector<8xf32> to vector<8x1xf32>
    %cst_48 = arith.constant 3.200000e+01 : f32
    %121 = vector.broadcast %cst_48 : f32 to vector<8x1xf32>
    %122 = arith.divf %120, %121 : vector<8x1xf32>
    %123 = arith.mulf %117, %117 : vector<8x1xf32>
    %124 = arith.subf %122, %123 : vector<8x1xf32>
    %cst_49 = arith.constant 0.000000e+00 : f32
    %125 = vector.broadcast %cst_49 : f32 to vector<8x1xf32>
    %126 = arith.maximumf %124, %125 : vector<8x1xf32>
    %127 = vector.broadcast %117 : vector<8x1xf32> to vector<8x32xf32>
    %128 = arith.subf %111, %127 : vector<8x32xf32>
    %cst_50 = arith.constant 9.99999974E-6 : f32
    %129 = vector.broadcast %cst_50 : f32 to vector<8x1xf32>
    %130 = arith.addf %126, %129 : vector<8x1xf32>
    %131 = math.rsqrt %130 : vector<8x1xf32>
    %132 = vector.broadcast %131 : vector<8x1xf32> to vector<8x32xf32>
    %133 = arith.mulf %128, %132 : vector<8x32xf32>
    %134 = vector.broadcast %112 : vector<1x32xf32> to vector<8x32xf32>
    %135 = arith.mulf %133, %134 : vector<8x32xf32>
    %136 = vector.broadcast %113 : vector<1x32xf32> to vector<8x32xf32>
    %137 = arith.addf %135, %136 : vector<8x32xf32>
    %c0_51 = arith.constant 0 : index
    %c0_52 = arith.constant 0 : index
    %138 = vector.load %arg10[%c0_51, %c0_52] : memref<32x64xf32, #tpu.memory_space<vmem>>, vector<32x64xf32>
    %cst_53 = arith.constant dense<0.000000e+00> : vector<8x64xf32>
    %139 = tpu.matmul %137, %138, %cst_53 {dimension_numbers = #tpu.dot_dimension_numbers<[1], [0], [0], [1], [0, 0, 1, 1], [], []>} : vector<8x32xf32>, vector<32x64xf32>, vector<8x64xf32> -> vector<8x64xf32>
    %c0_54 = arith.constant 0 : index
    %c0_55 = arith.constant 0 : index
    %140 = vector.load %arg11[%c0_54, %c0_55] : memref<1x64xf32, #tpu.memory_space<vmem>>, vector<1x64xf32>
    %141 = vector.broadcast %140 : vector<1x64xf32> to vector<8x64xf32>
    %142 = arith.addf %139, %141 : vector<8x64xf32>
    %cst_56 = arith.constant 0.000000e+00 : f32
    %143 = vector.broadcast %cst_56 : f32 to vector<8x64xf32>
    %144 = arith.maximumf %142, %143 : vector<8x64xf32>
    %c0_57 = arith.constant 0 : index
    %c0_58 = arith.constant 0 : index
    %145 = vector.load %arg12[%c0_57, %c0_58] : memref<64x32xf32, #tpu.memory_space<vmem>>, vector<64x32xf32>
    %cst_59 = arith.constant dense<0.000000e+00> : vector<8x32xf32>
    %146 = tpu.matmul %144, %145, %cst_59 {dimension_numbers = #tpu.dot_dimension_numbers<[1], [0], [0], [1], [0, 0, 1, 1], [], []>} : vector<8x64xf32>, vector<64x32xf32>, vector<8x32xf32> -> vector<8x32xf32>
    %c0_60 = arith.constant 0 : index
    %c0_61 = arith.constant 0 : index
    %147 = vector.load %arg13[%c0_60, %c0_61] : memref<1x32xf32, #tpu.memory_space<vmem>>, vector<1x32xf32>
    %148 = vector.broadcast %147 : vector<1x32xf32> to vector<8x32xf32>
    %149 = arith.addf %146, %148 : vector<8x32xf32>
    %150 = arith.addf %111, %149 : vector<8x32xf32>
    %151 = vector.shape_cast %150 : vector<8x32xf32> to vector<1x8x32xf32>
    %c0_62 = arith.constant 0 : index
    %c0_63 = arith.constant 0 : index
    %c0_64 = arith.constant 0 : index
    %152 = vector.load %arg14[%c0_62, %c0_63, %c0_64] : memref<1x8x32xf32, #tpu.memory_space<vmem>>, vector<1x8x32xf32>
    tpu.vector_store %arg14[%c0_62, %c0_63, %c0_64], %151 {strides = array<i32>} : memref<1x8x32xf32, #tpu.memory_space<vmem>>, vector<1x8x32xf32>,
    return
  }
  func.func @transform_0(%arg0: i32) -> (i32, i32, i32) {
    %c0_i32 = arith.constant 0 : i32
    %c0_i32_0 = arith.constant 0 : i32
    %c0_i32_1 = arith.constant 0 : i32
    return %arg0, %c0_i32, %c0_i32_0 : i32, i32, i32
  }
  func.func @transform_1(%arg0: i32) -> (i32, i32) {
    %c0_i32 = arith.constant 0 : i32
    %c0_i32_0 = arith.constant 0 : i32
    %c0_i32_1 = arith.constant 0 : i32
    return %c0_i32, %c0_i32_0 : i32, i32
  }
  func.func @transform_2(%arg0: i32) -> (i32, i32) {
    %c0_i32 = arith.constant 0 : i32
    %c0_i32_0 = arith.constant 0 : i32
    %c0_i32_1 = arith.constant 0 : i32
    return %c0_i32, %c0_i32_0 : i32, i32
  }
  func.func @transform_3(%arg0: i32) -> (i32, i32) {
    %c0_i32 = arith.constant 0 : i32
    %c0_i32_0 = arith.constant 0 : i32
    %c0_i32_1 = arith.constant 0 : i32
    return %c0_i32, %c0_i32_0 : i32, i32
  }
  func.func @transform_4(%arg0: i32) -> (i32, i32) {
    %c0_i32 = arith.constant 0 : i32
    %c0_i32_0 = arith.constant 0 : i32
    %c0_i32_1 = arith.constant 0 : i32
    return %c0_i32, %c0_i32_0 : i32, i32
  }
  func.func @transform_5(%arg0: i32) -> (i32, i32) {
    %c0_i32 = arith.constant 0 : i32
    %c0_i32_0 = arith.constant 0 : i32
    %c0_i32_1 = arith.constant 0 : i32
    return %c0_i32, %c0_i32_0 : i32, i32
  }
  func.func @transform_6(%arg0: i32) -> (i32, i32) {
    %c0_i32 = arith.constant 0 : i32
    %c0_i32_0 = arith.constant 0 : i32
    %c0_i32_1 = arith.constant 0 : i32
    return %c0_i32, %c0_i32_0 : i32, i32
  }
  func.func @transform_7(%arg0: i32) -> (i32, i32) {
    %c0_i32 = arith.constant 0 : i32
    %c0_i32_0 = arith.constant 0 : i32
    %c0_i32_1 = arith.constant 0 : i32
    return %c0_i32, %c0_i32_0 : i32, i32
  }
  func.func @transform_8(%arg0: i32) -> (i32, i32) {
    %c0_i32 = arith.constant 0 : i32
    %c0_i32_0 = arith.constant 0 : i32
    %c0_i32_1 = arith.constant 0 : i32
    return %c0_i32, %c0_i32_0 : i32, i32
  }
  func.func @transform_9(%arg0: i32) -> (i32, i32) {
    %c0_i32 = arith.constant 0 : i32
    %c0_i32_0 = arith.constant 0 : i32
    %c0_i32_1 = arith.constant 0 : i32
    return %c0_i32, %c0_i32_0 : i32, i32
  }
  func.func @transform_10(%arg0: i32) -> (i32, i32) {
    %c0_i32 = arith.constant 0 : i32
    %c0_i32_0 = arith.constant 0 : i32
    %c0_i32_1 = arith.constant 0 : i32
    return %c0_i32, %c0_i32_0 : i32, i32
  }
  func.func @transform_11(%arg0: i32) -> (i32, i32) {
    %c0_i32 = arith.constant 0 : i32
    %c0_i32_0 = arith.constant 0 : i32
    %c0_i32_1 = arith.constant 0 : i32
    return %c0_i32, %c0_i32_0 : i32, i32
  }
  func.func @transform_12(%arg0: i32) -> (i32, i32) {
    %c0_i32 = arith.constant 0 : i32
    %c0_i32_0 = arith.constant 0 : i32
    %c0_i32_1 = arith.constant 0 : i32
    return %c0_i32, %c0_i32_0 : i32, i32
  }
  func.func @transform_13(%arg0: i32) -> (i32, i32, i32) {
    %c0_i32 = arith.constant 0 : i32
    %c0_i32_0 = arith.constant 0 : i32
    %c0_i32_1 = arith.constant 0 : i32
    return %arg0, %c0_i32, %c0_i32_0 : i32, i32, i32
  }
}

</mosaic_0001>

<llo_original>
// kernel: tpu_custom_call.1
$region0: #{tpu_custom_call.1}
  #allocation0 [shape = 'u32[]', space=smem, size = 0x4, offset = 0x4, fixed_abs, tag = 'smem constant byte address 0x4 - core index']
  #allocation1 [shape = 'u32[72,128]{1,0:T(1,128)}', space=vmem, size = 0x9000, scoped, tag = 'internal scratch']
  %s0 = inlined_call_operand.hbm [shape: f32[2,8,128], index: 0, kind: input, shape index: {}]
  %s1 = inlined_call_operand.hbm [shape: f32[8,128], index: 1, kind: input, shape index: {}]
  %s2 = inlined_call_operand.hbm [shape: f32[2,8,128], index: 2, kind: output, shape index: {}]
  %s3 = sld [smem:[#allocation0]]
  $region49: #{tpu_custom_call.1} parent=0
    _
  %s5 = ssub.s32 1, %s3
  %s6 = scalar_select 0, %s5, %s3
  $region1: #{tpu_custom_call.1} parent=0
    #allocation2 [shape = 'u8[8192]{0}', space=vmem, size = 0x2000, scoped, tag = 'input window, operand 0']
    #allocation3 [shape = 's32[2]{0}', space=sflag, size = 0x8, scoped, tag = 'scoped memory for tpu_custom_call.1']
    #allocation4 [shape = 's32[2]{0}', space=sflag, size = 0x8, scoped, tag = 'scoped memory for tpu_custom_call.1']
    #allocation5 [shape = 'u8[4096]{0}', space=vmem, size = 0x1000, scoped, tag = 'input window, operand 1, single buffered']
    #allocation6 [shape = 's32[1]{0}', space=sflag, size = 0x4, scoped, tag = 'scoped memory for tpu_custom_call.1']
    #allocation7 [shape = 'u8[8192]{0}', space=vmem, size = 0x2000, scoped, tag = 'output window, operand 0']
    %7 = vsyncpa [#allocation3], 0
    %s8 = scalar_lea.sflag [#allocation3], 1
    %9 = vsyncpa %s8, 0
    %10 = vsyncpa [#allocation6], 0
    %11 = vsyncpa [#allocation4], 0
    %s12 = scalar_lea.sflag [#allocation4], 1
    %13 = vsyncpa %s12, 0
    loop: start=0, step=1, limit=4
    $region2: #{tpu_custom_call.1} parent=1 // loop_pre_header
      _
    $region3: #{tpu_custom_call.1} parent=1 // loop_header
      %s15 = sphi 0, %s19
      %p16 = scmp.ge.s32.totalorder %s15, 4
      %s25 = sphi 0, %s27
      %s28 = sphi 0, %s25
      %s29 = sphi 0, %s28
      %s45 = sphi 0, %s29
      %s49 = sphi 0, %s49
      %s51 = sphi 0, %s49
      %s52 = sphi 0, %s51
      %s66 = sphi 0, %s52
      %s72 = sphi 0, %s74
      %s75 = sphi 0, %s72
      %s76 = sphi 0, %s75
      %s92 = sphi 0, %s76
    $region4: #{tpu_custom_call.1} parent=1 // loop_header_branch
      %18 = sbr.rel (%p16) target = $region8
    $region5: #{tpu_custom_call.1} parent=1 // loop_body
      %s20 = ssub.s32 %s15, 1
      %s21 = ssub.s32 %s15, 2
      %s22 = sadd.s32 %s15, 1
      %s23 = ssub.s32 %s15, %s22
      %p24 = scmp.eq.s32.totalorder %s23, 0
      %s26 = sadd.s32 %s25, 1
      %s27 = scalar_select %p24, %s25, %s26
      %p30 = pneg %p24
      %p31 = scmp.eq.s32.totalorder %s15, 1
      %p32 = por %p30, %p31
      %p33 = scmp.ne.s32.totalorder %s25, %s28
      %p34 = scmp.eq.s32.totalorder %s15, 0
      %p35 = por %p33, %p34
      %p36 = scmp.ne.s32.totalorder %s25, %s28
      %p37 = scmp.eq.s32.totalorder %s20, 1
      %p38 = por %p36, %p37
      %p39 = scmp.ne.s32.totalorder %s28, %s29
      %p40 = scmp.eq.s32.totalorder %s20, 0
      %p41 = por %p39, %p40
      %p42 = scmp.ne.s32.totalorder %s28, %s29
      %p43 = scmp.eq.s32.totalorder %s21, 1
      %p44 = por %p42, %p43
      %p46 = scmp.ne.s32.totalorder %s29, %s45
      %p47 = scmp.eq.s32.totalorder %s21, 0
      %p48 = por %p46, %p47
      %s50 = sadd.s32 %s49, 1
      %p53 = scmp.eq.s32.totalorder %s15, 1
      %p54 = scmp.ne.s32.totalorder %s49, %s51
      %p55 = scmp.eq.s32.totalorder %s15, 0
      %p56 = por %p54, %p55
      %p57 = scmp.ne.s32.totalorder %s49, %s51
      %p58 = scmp.eq.s32.totalorder %s20, 1
      %p59 = por %p57, %p58
      %p60 = scmp.ne.s32.totalorder %s51, %s52
      %p61 = scmp.eq.s32.totalorder %s20, 0
      %p62 = por %p60, %p61
      %p63 = scmp.ne.s32.totalorder %s51, %s52
      %p64 = scmp.eq.s32.totalorder %s21, 1
      %p65 = por %p63, %p64
      %p67 = scmp.ne.s32.totalorder %s52, %s66
      %p68 = scmp.eq.s32.totalorder %s21, 0
      %p69 = por %p67, %p68
      %s70 = ssub.s32 %s15, %s22
      %p71 = scmp.eq.s32.totalorder %s70, 0
      %s73 = sadd.s32 %s72, 1
      %s74 = scalar_select %p71, %s72, %s73
      %p77 = pneg %p71
      %p78 = scmp.eq.s32.totalorder %s15, 1
      %p79 = por %p77, %p78
      %p80 = scmp.ne.s32.totalorder %s72, %s75
      %p81 = scmp.eq.s32.totalorder %s15, 0
      %p82 = por %p80, %p81
      %p83 = scmp.ne.s32.totalorder %s72, %s75
      %p84 = scmp.eq.s32.totalorder %s20, 1
      %p85 = por %p83, %p84
      %p86 = scmp.ne.s32.totalorder %s75, %s76
      %p87 = scmp.eq.s32.totalorder %s20, 0
      %p88 = por %p86, %p87
      %p89 = scmp.ne.s32.totalorder %s75, %s76
      %p90 = scmp.eq.s32.totalorder %s21, 1
      %p91 = por %p89, %p90
      %p93 = scmp.ne.s32.totalorder %s76, %s92
      %p94 = scmp.eq.s32.totalorder %s21, 0
      %p95 = por %p93, %p94
      %p96 = scmp.le.s32.totalorder 1, %s15
      %p97 = scmp.lt.s32.totalorder %s15, 3
      %p98 = pnand %p96, %p97
      %p99 = pneg %p98
      // Predicated region
      $region9: #{tpu_custom_call.1} parent=5 // pred_check
        _
      $region10: #{tpu_custom_call.1} parent=5 // pred_check_branch
        %101 = sbr.rel (%p98) target = $region12
      $region11: #{tpu_custom_call.1} parent=5 // pred_region
        %s102 = ssub.s32 %s15, 1
        // Predicated region
        $region13: #{tpu_custom_call.1} parent=11 // pred_check
          %p103 = pneg %p62
        $region14: #{tpu_custom_call.1} parent=11 // pred_check_branch
          %105 = sbr.rel (%p103) target = $region16
        $region15: #{tpu_custom_call.1} parent=11 // pred_region
          %107 = vsyncadd [#allocation6], 0
          %s109 = sshll.u32 %s1, 4
          %s110 = int_to_ptr.hbm [resolvable:$true] %s109
          %s111 = sshll.u32 [#allocation5], 4
          %s112 = int_to_ptr.vmem [resolvable:$true] %s111
          %114 = dma.hbm_to_vmem [thread:$0]  %s110, 128, %s112, [#allocation6]
        $region16: #{tpu_custom_call.1} parent=11 // pred_fallthru
          _
      $region12: #{tpu_custom_call.1} parent=5 // pred_fallthru
        _
      %p115 = scmp.lt.s32.totalorder %s15, 2
      // Predicated region
      $region17: #{tpu_custom_call.1} parent=5 // pred_check
        %p116 = pneg %p115
      $region18: #{tpu_custom_call.1} parent=5 // pred_check_branch
        %118 = sbr.rel (%p116) target = $region20
      $region19: #{tpu_custom_call.1} parent=5 // pred_region
        // Predicated region
        $region21: #{tpu_custom_call.1} parent=19 // pred_check
          %p119 = pneg %p35
        $region22: #{tpu_custom_call.1} parent=19 // pred_check_branch
          %121 = sbr.rel (%p119) target = $region24
        $region23: #{tpu_custom_call.1} parent=19 // pred_region
          %s122 = sand.u32 %s25, 1
          %s123 = scalar_lea.sflag [#allocation3], %s122
          %s124 = sand.u32 %s25, 1
          %s125 = smul.addr %s124, 8
          %s126 = scalar_lea.vmem [#allocation2], %s125
          %128 = vsyncadd %s123, 0
          %s129 = smul.addr %s15, 8
          %s130 = scalar_lea.hbm %s0, %s129
          %s132 = sshll.u32 %s130, 4
          %s133 = int_to_ptr.hbm [resolvable:$true] %s132
          %s134 = sshll.u32 %s126, 4
          %s135 = int_to_ptr.vmem [resolvable:$true] %s134
          %137 = dma.hbm_to_vmem [thread:$0]  %s133, 128, %s135, %s123
        $region24: #{tpu_custom_call.1} parent=19 // pred_fallthru
          _
      $region20: #{tpu_custom_call.1} parent=5 // pred_fallthru
        _
      %p138 = scmp.le.s32.totalorder 1, %s15
      %p139 = scmp.lt.s32.totalorder %s15, 3
      %p140 = pnand %p138, %p139
      %p141 = pneg %p140
      // Predicated region
      $region25: #{tpu_custom_call.1} parent=5 // pred_check
        _
      $region26: #{tpu_custom_call.1} parent=5 // pred_check_branch
        %143 = sbr.rel (%p140) target = $region28
      $region27: #{tpu_custom_call.1} parent=5 // pred_region
        %s144 = ssub.s32 %s15, 1
        %s145 = sand.u32 %s28, 1
        %s146 = scalar_lea.sflag [#allocation3], %s145
        %s147 = sand.u32 %s28, 1
        %s148 = smul.addr %s147, 8
        %s149 = scalar_lea.vmem [#allocation2], %s148
        // Predicated region
        $region29: #{tpu_custom_call.1} parent=27 // pred_check
          %p150 = pneg %p41
        $region30: #{tpu_custom_call.1} parent=27 // pred_check_branch
          %152 = sbr.rel (%p150) target = $region32
        $region31: #{tpu_custom_call.1} parent=27 // pred_region
          %154 = dma.done %s146, 128
        $region32: #{tpu_custom_call.1} parent=27 // pred_fallthru
          _
        // Predicated region
        $region33: #{tpu_custom_call.1} parent=27 // pred_check
          %p155 = pneg %p62
        $region34: #{tpu_custom_call.1} parent=27 // pred_check_branch
          %157 = sbr.rel (%p155) target = $region36
        $region35: #{tpu_custom_call.1} parent=27 // pred_region
          %159 = dma.done [#allocation6], 128
        $region36: #{tpu_custom_call.1} parent=27 // pred_fallthru
          _
        %s160 = sand.u32 %s28, 1
        %s161 = scalar_lea.sflag [#allocation3], %s160
        %s162 = sand.u32 %s28, 1
        %s163 = smul.addr %s162, 8
        %s164 = scalar_lea.vmem [#allocation2], %s163
        %p165 = pneg %p41
        %p166 = pneg %p38
        %p167 = pneg %p62
        %p168 = pneg %p59
        %p169 = pneg %p88
        %p170 = pneg %p85
        %s171 = sand.u32 %s75, 1
        %s172 = scalar_lea.sflag [#allocation4], %s171
        %s173 = sand.u32 %s75, 1
        %s174 = smul.addr %s173, 8
        %s175 = scalar_lea.vmem [#allocation7], %s174
        %v176 = vld [vmem:[%s149] sm:$0xff]
        %v177 = vld [vmem:[#allocation5] sm:$0xff]
        %v178 = vadd.f32 %v176, %v177
        %179 = vst [vmem:[%s175] sm:$0xff] %v178
        %s180 = sand.u32 %s75, 1
        %s181 = scalar_lea.sflag [#allocation4], %s180
        %s182 = sand.u32 %s75, 1
        %s183 = smul.addr %s182, 8
        %s184 = scalar_lea.vmem [#allocation7], %s183
        // Predicated region
        $region37: #{tpu_custom_call.1} parent=27 // pred_check
          %p185 = pneg %p85
        $region38: #{tpu_custom_call.1} parent=27 // pred_check_branch
          %187 = sbr.rel (%p185) target = $region40
        $region39: #{tpu_custom_call.1} parent=27 // pred_region
          %189 = vsyncadd %s181, 0
          %s190 = smul.addr %s20, 8
          %s191 = scalar_lea.hbm %s2, %s190
          %s193 = sshll.u32 %s184, 4
          %s194 = int_to_ptr.vmem [resolvable:$true] %s193
          %s195 = sshll.u32 %s191, 4
          %s196 = int_to_ptr.hbm [resolvable:$true] %s195
          %198 = dma.vmem_to_hbm [thread:$0]  %s194, 128, %s196, %s181
        $region40: #{tpu_custom_call.1} parent=27 // pred_fallthru
          _
      $region28: #{tpu_custom_call.1} parent=5 // pred_fallthru
        _
      %p199 = scmp.le.s32.totalorder 2, %s15
      // Predicated region
      $region41: #{tpu_custom_call.1} parent=5 // pred_check
        %p200 = pneg %p199
      $region42: #{tpu_custom_call.1} parent=5 // pred_check_branch
        %202 = sbr.rel (%p200) target = $region44
      $region43: #{tpu_custom_call.1} parent=5 // pred_region
        %s203 = ssub.s32 %s15, 2
        // Predicated region
        $region45: #{tpu_custom_call.1} parent=43 // pred_check
          %p204 = pneg %p91
        $region46: #{tpu_custom_call.1} parent=43 // pred_check_branch
          %206 = sbr.rel (%p204) target = $region48
        $region47: #{tpu_custom_call.1} parent=43 // pred_region
          %s207 = sand.u32 %s76, 1
          %s208 = scalar_lea.sflag [#allocation4], %s207
          %s209 = sand.u32 %s76, 1
          %s210 = smul.addr %s209, 8
          %s211 = scalar_lea.vmem [#allocation7], %s210
          %213 = dma.done %s208, 128
        $region48: #{tpu_custom_call.1} parent=43 // pred_fallthru
          _
      $region44: #{tpu_custom_call.1} parent=5 // pred_fallthru
        _
    $region6: #{tpu_custom_call.1} parent=1 // loop_footer
      %s19 = sadd.s32 1, %s15
    $region7: #{tpu_custom_call.1} parent=1 // loop_footer_branch
      %14 = sbr.rel target = $region3
    $region8: #{tpu_custom_call.1} parent=1 // loop_exit
      _
    %214 = vsyncpa [#allocation3], 1
    %s215 = scalar_lea.sflag [#allocation3], 1
    %216 = vsyncpa %s215, 1
    %217 = vsyncpa [#allocation6], 1
    %218 = vsyncpa [#allocation4], 1
    %s219 = scalar_lea.sflag [#allocation4], 1
    %220 = vsyncpa %s219, 1

// kernel: tpu_custom_call.1
$region0: #{tpu_custom_call.1}
  #allocation0 [shape = 'u32[]', space=smem, size = 0x4, offset = 0x4, fixed_abs, tag = 'smem constant byte address 0x4 - core index']
  #allocation1 [shape = 'u32[72,128]{1,0:T(1,128)}', space=vmem, size = 0x9000, scoped, tag = 'internal scratch']
  %s0 = inlined_call_operand.hbm [shape: f32[2,8,32], index: 0, kind: input, shape index: {}]
  %s1 = inlined_call_operand.hbm [shape: f32[1,32], index: 1, kind: input, shape index: {}]
  %s2 = inlined_call_operand.vmem [shape: f32[1,32], index: 2, kind: input, shape index: {}]
  %s3 = inlined_call_operand.vmem [shape: f32[32,96], index: 3, kind: input, shape index: {}]
  %s4 = inlined_call_operand.vmem [shape: f32[1,96], index: 4, kind: input, shape index: {}]
  %s5 = inlined_call_operand.vmem [shape: f32[32,32], index: 5, kind: input, shape index: {}]
  %s6 = inlined_call_operand.vmem [shape: f32[1,32], index: 6, kind: input, shape index: {}]
  %s7 = inlined_call_operand.vmem [shape: f32[1,32], index: 7, kind: input, shape index: {}]
  %s8 = inlined_call_operand.vmem [shape: f32[1,32], index: 8, kind: input, shape index: {}]
  %s9 = inlined_call_operand.vmem [shape: f32[32,64], index: 9, kind: input, shape index: {}]
  %s10 = inlined_call_operand.vmem [shape: f32[1,64], index: 10, kind: input, shape index: {}]
  %s11 = inlined_call_operand.vmem [shape: f32[64,32], index: 11, kind: input, shape index: {}]
  %s12 = inlined_call_operand.vmem [shape: f32[1,32], index: 12, kind: input, shape index: {}]
  %s13 = inlined_call_operand.hbm [shape: f32[2,8,32], index: 13, kind: output, shape index: {}]
  %s14 = sld [smem:[#allocation0]]
  $region93: #{tpu_custom_call.1} parent=0
    _
  %s16 = ssub.s32 1, %s14
  %s17 = scalar_select 0, %s16, %s14
  $region1: #{tpu_custom_call.1} parent=0
    #allocation2 [shape = 'u8[8192]{0}', space=vmem, size = 0x2000, scoped, tag = 'input window, operand 0']
    #allocation3 [shape = 's32[2]{0}', space=sflag, size = 0x8, scoped, tag = 'scoped memory for tpu_custom_call.1']
    #allocation4 [shape = 's32[2]{0}', space=sflag, size = 0x8, scoped, tag = 'scoped memory for tpu_custom_call.1']
    #allocation5 [shape = 'u8[512]{0}', space=vmem, size = 0x400, scoped, tag = 'input window, operand 1, single buffered']
    #allocation6 [shape = 's32[1]{0}', space=sflag, size = 0x4, scoped, tag = 'scoped memory for tpu_custom_call.1']
    #allocation7 [shape = 'u8[8192]{0}', space=vmem, size = 0x2000, scoped, tag = 'output window, operand 0']
    %18 = vsyncpa [#allocation3], 0
    %s19 = scalar_lea.sflag [#allocation3], 1
    %20 = vsyncpa %s19, 0
    %21 = vsyncpa [#allocation6], 0
    %22 = vsyncpa [#allocation4], 0
    %s23 = scalar_lea.sflag [#allocation4], 1
    %24 = vsyncpa %s23, 0
    loop: start=0, step=1, limit=4
    $region2: #{tpu_custom_call.1} parent=1 // loop_pre_header
      _
    $region3: #{tpu_custom_call.1} parent=1 // loop_header
      %s26 = sphi 0, %s30
      %p27 = scmp.ge.s32.totalorder %s26, 4
      %s36 = sphi 0, %s38
      %s39 = sphi 0, %s36
      %s40 = sphi 0, %s39
      %s56 = sphi 0, %s40
      %s60 = sphi 0, %s60
      %s62 = sphi 0, %s60
      %s63 = sphi 0, %s62
      %s77 = sphi 0, %s63
      %s81 = sphi 0, %s81
      %s83 = sphi 0, %s81
      %s84 = sphi 0, %s83
      %s98 = sphi 0, %s84
      %s102 = sphi 0, %s102
      %s104 = sphi 0, %s102
      %s105 = sphi 0, %s104
      %s119 = sphi 0, %s105
      %s123 = sphi 0, %s123
      %s125 = sphi 0, %s123
      %s126 = sphi 0, %s125
      %s140 = sphi 0, %s126
      %s144 = sphi 0, %s144
      %s146 = sphi 0, %s144
      %s147 = sphi 0, %s146
      %s161 = sphi 0, %s147
      %s165 = sphi 0, %s165
      %s167 = sphi 0, %s165
      %s168 = sphi 0, %s167
      %s182 = sphi 0, %s168
      %s186 = sphi 0, %s186
      %s188 = sphi 0, %s186
      %s189 = sphi 0, %s188
      %s203 = sphi 0, %s189
      %s207 = sphi 0, %s207
      %s209 = sphi 0, %s207
      %s210 = sphi 0, %s209
      %s224 = sphi 0, %s210
      %s228 = sphi 0, %s228
      %s230 = sphi 0, %s228
      %s231 = sphi 0, %s230
      %s245 = sphi 0, %s231
      %s249 = sphi 0, %s249
      %s251 = sphi 0, %s249
      %s252 = sphi 0, %s251
      %s266 = sphi 0, %s252
      %s270 = sphi 0, %s270
      %s272 = sphi 0, %s270
      %s273 = sphi 0, %s272
      %s287 = sphi 0, %s273
      %s291 = sphi 0, %s291
      %s293 = sphi 0, %s291
      %s294 = sphi 0, %s293
      %s308 = sphi 0, %s294
      %s314 = sphi 0, %s316
      %s317 = sphi 0, %s314
      %s318 = sphi 0, %s317
      %s334 = sphi 0, %s318
    $region4: #{tpu_custom_call.1} parent=1 // loop_header_branch
      %29 = sbr.rel (%p27) target = $region8
    $region5: #{tpu_custom_call.1} parent=1 // loop_body
      %s31 = ssub.s32 %s26, 1
      %s32 = ssub.s32 %s26, 2
      %s33 = sadd.s32 %s26, 1
      %s34 = ssub.s32 %s26, %s33
      %p35 = scmp.eq.s32.totalorder %s34, 0
      %s37 = sadd.s32 %s36, 1
      %s38 = scalar_select %p35, %s36, %s37
      %p41 = pneg %p35
      %p42 = scmp.eq.s32.totalorder %s26, 1
      %p43 = por %p41, %p42
      %p44 = scmp.ne.s32.totalorder %s36, %s39
      %p45 = scmp.eq.s32.totalorder %s26, 0
      %p46 = por %p44, %p45
      %p47 = scmp.ne.s32.totalorder %s36, %s39
      %p48 = scmp.eq.s32.totalorder %s31, 1
      %p49 = por %p47, %p48
      %p50 = scmp.ne.s32.totalorder %s39, %s40
      %p51 = scmp.eq.s32.totalorder %s31, 0
      %p52 = por %p50, %p51
      %p53 = scmp.ne.s32.totalorder %s39, %s40
      %p54 = scmp.eq.s32.totalorder %s32, 1
      %p55 = por %p53, %p54
      %p57 = scmp.ne.s32.totalorder %s40, %s56
      %p58 = scmp.eq.s32.totalorder %s32, 0
      %p59 = por %p57, %p58
      %s61 = sadd.s32 %s60, 1
      %p64 = scmp.eq.s32.totalorder %s26, 1
      %p65 = scmp.ne.s32.totalorder %s60, %s62
      %p66 = scmp.eq.s32.totalorder %s26, 0
      %p67 = por %p65, %p66
      %p68 = scmp.ne.s32.totalorder %s60, %s62
      %p69 = scmp.eq.s32.totalorder %s31, 1
      %p70 = por %p68, %p69
      %p71 = scmp.ne.s32.totalorder %s62, %s63
      %p72 = scmp.eq.s32.totalorder %s31, 0
      %p73 = por %p71, %p72
      %p74 = scmp.ne.s32.totalorder %s62, %s63
      %p75 = scmp.eq.s32.totalorder %s32, 1
      %p76 = por %p74, %p75
      %p78 = scmp.ne.s32.totalorder %s63, %s77
      %p79 = scmp.eq.s32.totalorder %s32, 0
      %p80 = por %p78, %p79
      %s82 = sadd.s32 %s81, 1
      %p85 = scmp.eq.s32.totalorder %s26, 1
      %p86 = scmp.ne.s32.totalorder %s81, %s83
      %p87 = scmp.eq.s32.totalorder %s26, 0
      %p88 = por %p86, %p87
      %p89 = scmp.ne.s32.totalorder %s81, %s83
      %p90 = scmp.eq.s32.totalorder %s31, 1
      %p91 = por %p89, %p90
      %p92 = scmp.ne.s32.totalorder %s83, %s84
      %p93 = scmp.eq.s32.totalorder %s31, 0
      %p94 = por %p92, %p93
      %p95 = scmp.ne.s32.totalorder %s83, %s84
      %p96 = scmp.eq.s32.totalorder %s32, 1
      %p97 = por %p95, %p96
      %p99 = scmp.ne.s32.totalorder %s84, %s98
      %p100 = scmp.eq.s32.totalorder %s32, 0
      %p101 = por %p99, %p100
      %s103 = sadd.s32 %s102, 1
      %p106 = scmp.eq.s32.totalorder %s26, 1
      %p107 = scmp.ne.s32.totalorder %s102, %s104
      %p108 = scmp.eq.s32.totalorder %s26, 0
      %p109 = por %p107, %p108
      %p110 = scmp.ne.s32.totalorder %s102, %s104
      %p111 = scmp.eq.s32.totalorder %s31, 1
      %p112 = por %p110, %p111
      %p113 = scmp.ne.s32.totalorder %s104, %s105
      %p114 = scmp.eq.s32.totalorder %s31, 0
      %p115 = por %p113, %p114
      %p116 = scmp.ne.s32.totalorder %s104, %s105
      %p117 = scmp.eq.s32.totalorder %s32, 1
      %p118 = por %p116, %p117
      %p120 = scmp.ne.s32.totalorder %s105, %s119
      %p121 = scmp.eq.s32.totalorder %s32, 0
      %p122 = por %p120, %p121
      %s124 = sadd.s32 %s123, 1
      %p127 = scmp.eq.s32.totalorder %s26, 1
      %p128 = scmp.ne.s32.totalorder %s123, %s125
      %p129 = scmp.eq.s32.totalorder %s26, 0
      %p130 = por %p128, %p129
      %p131 = scmp.ne.s32.totalorder %s123, %s125
      %p132 = scmp.eq.s32.totalorder %s31, 1
      %p133 = por %p131, %p132
      %p134 = scmp.ne.s32.totalorder %s125, %s126
      %p135 = scmp.eq.s32.totalorder %s31, 0
      %p136 = por %p134, %p135
      %p137 = scmp.ne.s32.totalorder %s125, %s126
      %p138 = scmp.eq.s32.totalorder %s32, 1
      %p139 = por %p137, %p138
      %p141 = scmp.ne.s32.totalorder %s126, %s140
      %p142 = scmp.eq.s32.totalorder %s32, 0
      %p143 = por %p141, %p142
      %s145 = sadd.s32 %s144, 1
      %p148 = scmp.eq.s32.totalorder %s26, 1
      %p149 = scmp.ne.s32.totalorder %s144, %s146
      %p150 = scmp.eq.s32.totalorder %s26, 0
      %p151 = por %p149, %p150
      %p152 = scmp.ne.s32.totalorder %s144, %s146
      %p153 = scmp.eq.s32.totalorder %s31, 1
      %p154 = por %p152, %p153
      %p155 = scmp.ne.s32.totalorder %s146, %s147
      %p156 = scmp.eq.s32.totalorder %s31, 0
      %p157 = por %p155, %p156
      %p158 = scmp.ne.s32.totalorder %s146, %s147
      %p159 = scmp.eq.s32.totalorder %s32, 1
      %p160 = por %p158, %p159
      %p162 = scmp.ne.s32.totalorder %s147, %s161
      %p163 = scmp.eq.s32.totalorder %s32, 0
      %p164 = por %p162, %p163
      %s166 = sadd.s32 %s165, 1
      %p169 = scmp.eq.s32.totalorder %s26, 1
      %p170 = scmp.ne.s32.totalorder %s165, %s167
      %p171 = scmp.eq.s32.totalorder %s26, 0
      %p172 = por %p170, %p171
      %p173 = scmp.ne.s32.totalorder %s165, %s167
      %p174 = scmp.eq.s32.totalorder %s31, 1
      %p175 = por %p173, %p174
      %p176 = scmp.ne.s32.totalorder %s167, %s168
      %p177 = scmp.eq.s32.totalorder %s31, 0
      %p178 = por %p176, %p177
      %p179 = scmp.ne.s32.totalorder %s167, %s168
      %p180 = scmp.eq.s32.totalorder %s32, 1
      %p181 = por %p179, %p180
      %p183 = scmp.ne.s32.totalorder %s168, %s182
      %p184 = scmp.eq.s32.totalorder %s32, 0
      %p185 = por %p183, %p184
      %s187 = sadd.s32 %s186, 1
      %p190 = scmp.eq.s32.totalorder %s26, 1
      %p191 = scmp.ne.s32.totalorder %s186, %s188
      %p192 = scmp.eq.s32.totalorder %s26, 0
      %p193 = por %p191, %p192
      %p194 = scmp.ne.s32.totalorder %s186, %s188
      %p195 = scmp.eq.s32.totalorder %s31, 1
      %p196 = por %p194, %p195
      %p197 = scmp.ne.s32.totalorder %s188, %s189
      %p198 = scmp.eq.s32.totalorder %s31, 0
      %p199 = por %p197, %p198
      %p200 = scmp.ne.s32.totalorder %s188, %s189
      %p201 = scmp.eq.s32.totalorder %s32, 1
      %p202 = por %p200, %p201
      %p204 = scmp.ne.s32.totalorder %s189, %s203
      %p205 = scmp.eq.s32.totalorder %s32, 0
      %p206 = por %p204, %p205
      %s208 = sadd.s32 %s207, 1
      %p211 = scmp.eq.s32.totalorder %s26, 1
      %p212 = scmp.ne.s32.totalorder %s207, %s209
      %p213 = scmp.eq.s32.totalorder %s26, 0
      %p214 = por %p212, %p213
      %p215 = scmp.ne.s32.totalorder %s207, %s209
      %p216 = scmp.eq.s32.totalorder %s31, 1
      %p217 = por %p215, %p216
      %p218 = scmp.ne.s32.totalorder %s209, %s210
      %p219 = scmp.eq.s32.totalorder %s31, 0
      %p220 = por %p218, %p219
      %p221 = scmp.ne.s32.totalorder %s209, %s210
      %p222 = scmp.eq.s32.totalorder %s32, 1
      %p223 = por %p221, %p222
      %p225 = scmp.ne.s32.totalorder %s210, %s224
      %p226 = scmp.eq.s32.totalorder %s32, 0
      %p227 = por %p225, %p226
      %s229 = sadd.s32 %s228, 1
      %p232 = scmp.eq.s32.totalorder %s26, 1
      %p233 = scmp.ne.s32.totalorder %s228, %s230
      %p234 = scmp.eq.s32.totalorder %s26, 0
      %p235 = por %p233, %p234
      %p236 = scmp.ne.s32.totalorder %s228, %s230
      %p237 = scmp.eq.s32.totalorder %s31, 1
      %p238 = por %p236, %p237
      %p239 = scmp.ne.s32.totalorder %s230, %s231
      %p240 = scmp.eq.s32.totalorder %s31, 0
      %p241 = por %p239, %p240
      %p242 = scmp.ne.s32.totalorder %s230, %s231
      %p243 = scmp.eq.s32.totalorder %s32, 1
      %p244 = por %p242, %p243
      %p246 = scmp.ne.s32.totalorder %s231, %s245
      %p247 = scmp.eq.s32.totalorder %s32, 0
      %p248 = por %p246, %p247
      %s250 = sadd.s32 %s249, 1
      %p253 = scmp.eq.s32.totalorder %s26, 1
      %p254 = scmp.ne.s32.totalorder %s249, %s251
      %p255 = scmp.eq.s32.totalorder %s26, 0
      %p256 = por %p254, %p255
      %p257 = scmp.ne.s32.totalorder %s249, %s251
      %p258 = scmp.eq.s32.totalorder %s31, 1
      %p259 = por %p257, %p258
      %p260 = scmp.ne.s32.totalorder %s251, %s252
      %p261 = scmp.eq.s32.totalorder %s31, 0
      %p262 = por %p260, %p261
      %p263 = scmp.ne.s32.totalorder %s251, %s252
      %p264 = scmp.eq.s32.totalorder %s32, 1
      %p265 = por %p263, %p264
      %p267 = scmp.ne.s32.totalorder %s252, %s266
      %p268 = scmp.eq.s32.totalorder %s32, 0
      %p269 = por %p267, %p268
      %s271 = sadd.s32 %s270, 1
      %p274 = scmp.eq.s32.totalorder %s26, 1
      %p275 = scmp.ne.s32.totalorder %s270, %s272
      %p276 = scmp.eq.s32.totalorder %s26, 0
      %p277 = por %p275, %p276
      %p278 = scmp.ne.s32.totalorder %s270, %s272
      %p279 = scmp.eq.s32.totalorder %s31, 1
      %p280 = por %p278, %p279
      %p281 = scmp.ne.s32.totalorder %s272, %s273
      %p282 = scmp.eq.s32.totalorder %s31, 0
      %p283 = por %p281, %p282
      %p284 = scmp.ne.s32.totalorder %s272, %s273
      %p285 = scmp.eq.s32.totalorder %s32, 1
      %p286 = por %p284, %p285
      %p288 = scmp.ne.s32.totalorder %s273, %s287
      %p289 = scmp.eq.s32.totalorder %s32, 0
      %p290 = por %p288, %p289
      %s292 = sadd.s32 %s291, 1
      %p295 = scmp.eq.s32.totalorder %s26, 1
      %p296 = scmp.ne.s32.totalorder %s291, %s293
      %p297 = scmp.eq.s32.totalorder %s26, 0
      %p298 = por %p296, %p297
      %p299 = scmp.ne.s32.totalorder %s291, %s293
      %p300 = scmp.eq.s32.totalorder %s31, 1
      %p301 = por %p299, %p300
      %p302 = scmp.ne.s32.totalorder %s293, %s294
      %p303 = scmp.eq.s32.totalorder %s31, 0
      %p304 = por %p302, %p303
      %p305 = scmp.ne.s32.totalorder %s293, %s294
      %p306 = scmp.eq.s32.totalorder %s32, 1
      %p307 = por %p305, %p306
      %p309 = scmp.ne.s32.totalorder %s294, %s308
      %p310 = scmp.eq.s32.totalorder %s32, 0
      %p311 = por %p309, %p310
      %s312 = ssub.s32 %s26, %s33
      %p313 = scmp.eq.s32.totalorder %s312, 0
      %s315 = sadd.s32 %s314, 1
      %s316 = scalar_select %p313, %s314, %s315
      %p319 = pneg %p313
      %p320 = scmp.eq.s32.totalorder %s26, 1
      %p321 = por %p319, %p320
      %p322 = scmp.ne.s32.totalorder %s314, %s317
      %p323 = scmp.eq.s32.totalorder %s26, 0
      %p324 = por %p322, %p323
      %p325 = scmp.ne.s32.totalorder %s314, %s317
      %p326 = scmp.eq.s32.totalorder %s31, 1
      %p327 = por %p325, %p326
      %p328 = scmp.ne.s32.totalorder %s317, %s318
      %p329 = scmp.eq.s32.totalorder %s31, 0
      %p330 = por %p328, %p329
      %p331 = scmp.ne.s32.totalorder %s317, %s318
      %p332 = scmp.eq.s32.totalorder %s32, 1
      %p333 = por %p331, %p332
      %p335 = scmp.ne.s32.totalorder %s318, %s334
      %p336 = scmp.eq.s32.totalorder %s32, 0
      %p337 = por %p335, %p336
      %p338 = scmp.le.s32.totalorder 1, %s26
      %p339 = scmp.lt.s32.totalorder %s26, 3
      %p340 = pnand %p338, %p339
      %p341 = pneg %p340
      // Predicated region
      $region9: #{tpu_custom_call.1} parent=5 // pred_check
        _
      $region10: #{tpu_custom_call.1} parent=5 // pred_check_branch
        %343 = sbr.rel (%p340) target = $region12
      $region11: #{tpu_custom_call.1} parent=5 // pred_region
        %s344 = ssub.s32 %s26, 1
        // Predicated region
        $region13: #{tpu_custom_call.1} parent=11 // pred_check
          %p345 = pneg %p73
        $region14: #{tpu_custom_call.1} parent=11 // pred_check_branch
          %347 = sbr.rel (%p345) target = $region16
        $region15: #{tpu_custom_call.1} parent=11 // pred_region
          %349 = vsyncadd [#allocation6], 0
          %s351 = sshll.u32 %s1, 4
          %s352 = int_to_ptr.hbm [resolvable:$true] %s351
          %s353 = sshll.u32 [#allocation5], 4
          %s354 = int_to_ptr.vmem [resolvable:$true] %s353
          %356 = dma.hbm_to_vmem [thread:$0]  %s352, 16, %s354, [#allocation6]
        $region16: #{tpu_custom_call.1} parent=11 // pred_fallthru
          _
        // Predicated region
        $region17: #{tpu_custom_call.1} parent=11 // pred_check
          %p357 = pneg %p94
        $region18: #{tpu_custom_call.1} parent=11 // pred_check_branch
          %359 = sbr.rel (%p357) target = $region20
        $region19: #{tpu_custom_call.1} parent=11 // pred_region
          _
        $region20: #{tpu_custom_call.1} parent=11 // pred_fallthru
          _
        // Predicated region
        $region21: #{tpu_custom_call.1} parent=11 // pred_check
          %p360 = pneg %p115
        $region22: #{tpu_custom_call.1} parent=11 // pred_check_branch
          %362 = sbr.rel (%p360) target = $region24
        $region23: #{tpu_custom_call.1} parent=11 // pred_region
          _
        $region24: #{tpu_custom_call.1} parent=11 // pred_fallthru
          _
        // Predicated region
        $region25: #{tpu_custom_call.1} parent=11 // pred_check
          %p363 = pneg %p136
        $region26: #{tpu_custom_call.1} parent=11 // pred_check_branch
          %365 = sbr.rel (%p363) target = $region28
        $region27: #{tpu_custom_call.1} parent=11 // pred_region
          _
        $region28: #{tpu_custom_call.1} parent=11 // pred_fallthru
          _
        // Predicated region
        $region29: #{tpu_custom_call.1} parent=11 // pred_check
          %p366 = pneg %p157
        $region30: #{tpu_custom_call.1} parent=11 // pred_check_branch
          %368 = sbr.rel (%p366) target = $region32
        $region31: #{tpu_custom_call.1} parent=11 // pred_region
          _
        $region32: #{tpu_custom_call.1} parent=11 // pred_fallthru
          _
        // Predicated region
        $region33: #{tpu_custom_call.1} parent=11 // pred_check
          %p369 = pneg %p178
        $region34: #{tpu_custom_call.1} parent=11 // pred_check_branch
          %371 = sbr.rel (%p369) target = $region36
        $region35: #{tpu_custom_call.1} parent=11 // pred_region
          _
        $region36: #{tpu_custom_call.1} parent=11 // pred_fallthru
          _
        // Predicated region
        $region37: #{tpu_custom_call.1} parent=11 // pred_check
          %p372 = pneg %p199
        $region38: #{tpu_custom_call.1} parent=11 // pred_check_branch
          %374 = sbr.rel (%p372) target = $region40
        $region39: #{tpu_custom_call.1} parent=11 // pred_region
          _
        $region40: #{tpu_custom_call.1} parent=11 // pred_fallthru
          _
        // Predicated region
        $region41: #{tpu_custom_call.1} parent=11 // pred_check
          %p375 = pneg %p220
        $region42: #{tpu_custom_call.1} parent=11 // pred_check_branch
          %377 = sbr.rel (%p375) target = $region44
        $region43: #{tpu_custom_call.1} parent=11 // pred_region
          _
        $region44: #{tpu_custom_call.1} parent=11 // pred_fallthru
          _
        // Predicated region
        $region45: #{tpu_custom_call.1} parent=11 // pred_check
          %p378 = pneg %p241
        $region46: #{tpu_custom_call.1} parent=11 // pred_check_branch
          %380 = sbr.rel (%p378) target = $region48
        $region47: #{tpu_custom_call.1} parent=11 // pred_region
          _
        $region48: #{tpu_custom_call.1} parent=11 // pred_fallthru
          _
        // Predicated region
        $region49: #{tpu_custom_call.1} parent=11 // pred_check
          %p381 = pneg %p262
        $region50: #{tpu_custom_call.1} parent=11 // pred_check_branch
          %383 = sbr.rel (%p381) target = $region52
        $region51: #{tpu_custom_call.1} parent=11 // pred_region
          _
        $region52: #{tpu_custom_call.1} parent=11 // pred_fallthru
          _
        // Predicated region
        $region53: #{tpu_custom_call.1} parent=11 // pred_check
          %p384 = pneg %p283
        $region54: #{tpu_custom_call.1} parent=11 // pred_check_branch
          %386 = sbr.rel (%p384) target = $region56
        $region55: #{tpu_custom_call.1} parent=11 // pred_region
          _
        $region56: #{tpu_custom_call.1} parent=11 // pred_fallthru
          _
        // Predicated region
        $region57: #{tpu_custom_call.1} parent=11 // pred_check
          %p387 = pneg %p304
        $region58: #{tpu_custom_call.1} parent=11 // pred_check_branch
          %389 = sbr.rel (%p387) target = $region60
        $region59: #{tpu_custom_call.1} parent=11 // pred_region
          _
        $region60: #{tpu_custom_call.1} parent=11 // pred_fallthru
          _
      $region12: #{tpu_custom_call.1} parent=5 // pred_fallthru
        _
      %p390 = scmp.lt.s32.totalorder %s26, 2
      // Predicated region
      $region61: #{tpu_custom_call.1} parent=5 // pred_check
        %p391 = pneg %p390
      $region62: #{tpu_custom_call.1} parent=5 // pred_check_branch
        %393 = sbr.rel (%p391) target = $region64
      $region63: #{tpu_custom_call.1} parent=5 // pred_region
        // Predicated region
        $region65: #{tpu_custom_call.1} parent=63 // pred_check
          %p394 = pneg %p46
        $region66: #{tpu_custom_call.1} parent=63 // pred_check_branch
          %396 = sbr.rel (%p394) target = $region68
        $region67: #{tpu_custom_call.1} parent=63 // pred_region
          %s397 = sand.u32 %s36, 1
          %s398 = scalar_lea.sflag [#allocation3], %s397
          %s399 = sand.u32 %s36, 1
          %s400 = smul.addr %s399, 8
          %s401 = scalar_lea.vmem [#allocation2], %s400
          %403 = vsyncadd %s398, 0
          %s404 = smul.addr %s26, 8
          %s405 = scalar_lea.hbm %s0, %s404
          %s407 = sshll.u32 %s405, 4
          %s408 = int_to_ptr.hbm [resolvable:$true] %s407
          %s409 = sshll.u32 %s401, 4
          %s410 = int_to_ptr.vmem [resolvable:$true] %s409
          %412 = dma.hbm_to_vmem [thread:$0]  %s408, 128, %s410, %s398
        $region68: #{tpu_custom_call.1} parent=63 // pred_fallthru
          _
      $region64: #{tpu_custom_call.1} parent=5 // pred_fallthru
        _
      %p413 = scmp.le.s32.totalorder 1, %s26
      %p414 = scmp.lt.s32.totalorder %s26, 3
      %p415 = pnand %p413, %p414
      %p416 = pneg %p415
      // Predicated region
      $region69: #{tpu_custom_call.1} parent=5 // pred_check
        _
      $region70: #{tpu_custom_call.1} parent=5 // pred_check_branch
        %418 = sbr.rel (%p415) target = $region72
      $region71: #{tpu_custom_call.1} parent=5 // pred_region
        %s419 = ssub.s32 %s26, 1
        %s420 = sand.u32 %s39, 1
        %s421 = scalar_lea.sflag [#allocation3], %s420
        %s422 = sand.u32 %s39, 1
        %s423 = smul.addr %s422, 8
        %s424 = scalar_lea.vmem [#allocation2], %s423
        // Predicated region
        $region73: #{tpu_custom_call.1} parent=71 // pred_check
          %p425 = pneg %p52
        $region74: #{tpu_custom_call.1} parent=71 // pred_check_branch
          %427 = sbr.rel (%p425) target = $region76
        $region75: #{tpu_custom_call.1} parent=71 // pred_region
          %429 = dma.done %s421, 128
        $region76: #{tpu_custom_call.1} parent=71 // pred_fallthru
          _
        // Predicated region
        $region77: #{tpu_custom_call.1} parent=71 // pred_check
          %p430 = pneg %p73
        $region78: #{tpu_custom_call.1} parent=71 // pred_check_branch
          %432 = sbr.rel (%p430) target = $region80
        $region79: #{tpu_custom_call.1} parent=71 // pred_region
          %434 = dma.done [#allocation6], 16
        $region80: #{tpu_custom_call.1} parent=71 // pred_fallthru
          _
        %s435 = sand.u32 %s39, 1
        %s436 = scalar_lea.sflag [#allocation3], %s435
        %s437 = sand.u32 %s39, 1
        %s438 = smul.addr %s437, 8
        %s439 = scalar_lea.vmem [#allocation2], %s438
        %p440 = pneg %p52
        %p441 = pneg %p49
        %p442 = pneg %p73
        %p443 = pneg %p70
        %p444 = pneg %p94
        %p445 = pneg %p91
        %p446 = pneg %p115
        %p447 = pneg %p112
        %p448 = pneg %p136
        %p449 = pneg %p133
        %p450 = pneg %p157
        %p451 = pneg %p154
        %p452 = pneg %p178
        %p453 = pneg %p175
        %p454 = pneg %p199
        %p455 = pneg %p196
        %p456 = pneg %p220
        %p457 = pneg %p217
        %p458 = pneg %p241
        %p459 = pneg %p238
        %p460 = pneg %p262
        %p461 = pneg %p259
        %p462 = pneg %p283
        %p463 = pneg %p280
        %p464 = pneg %p304
        %p465 = pneg %p301
        %p466 = pneg %p330
        %p467 = pneg %p327
        %s468 = sand.u32 %s317, 1
        %s469 = scalar_lea.sflag [#allocation4], %s468
        %s470 = sand.u32 %s317, 1
        %s471 = smul.addr %s470, 8
        %s472 = scalar_lea.vmem [#allocation7], %s471
        %v473 = vld [vmem:[%s424] sm:$0xff]
        %v474 = vld [vmem:[#allocation5] sm:$0x1]
        %v475 = vld [vmem:[%s2] sm:$0x1]
        %vm476 = vcmask 261120
        %v477 = vsel %vm476, %v473, 0.0
        %478 = vadd.xlane.f32.xlu0 %v477
        %v479 = vpop.xlane.xlu0 %478
        %v480 = vrcp.pop 32.0
        %v481 = vmul.f32 32.0, %v480
        %v482 = vsub.f32 1.0, %v481
        %v483 = vmul.f32 %v480, %v482
        %v484 = vadd.f32 %v480, %v483
        %vm485 = vweird.f32 %v480
        %v486 = vsel %vm485, %v480, %v484
        %v487 = vmul.f32 %v479, %v486
        %v488 = vmul.f32 %v473, %v473
        %v489 = vsel %vm476, %v488, 0.0
        %490 = vadd.xlane.f32.xlu0 %v489
        %v491 = vpop.xlane.xlu0 %490
        %v492 = vmul.f32 %v491, %v486
        %v493 = vmul.f32 %v487, %v487
        %v494 = vsub.f32 %v492, %v493
        %v495 = vmax.f32 %v494, 0.0
        %v496 = vsub.f32 %v473, %v487
        %v497 = vadd.f32 %v495, 1e-05
        %v498 = vrsqrt.pop %v497
        %v499 = vmul.f32 %v498, %v497
        %v500 = vmul.f32 %v499, %v498
        %v501 = vmul.f32 0.5, %v500
        %v502 = vsub.f32 1.5, %v501
        %v503 = vmul.f32 %v498, %v502
        %vm504 = vweird.f32 %v497
        %vm505 = vweird.f32 %v498
        %vm506 = vmor %vm504, %vm505
        %v507 = vsel %vm506, %v498, %v503
        %v508 = vmul.f32 %v496, %v507
        %v510 = vperm.slane %v474, 0
        %v512 = vmul.f32 %v508, %v510
        %v514 = vperm.slane %v475, 0
        %v516 = vadd.f32 %v512, %v514
        %v517 = vld [vmem:[%s3] sm:$0xff]
        %v518 = vld [vmem:[%s3 + $0x8] sm:$0xff]
        %v519 = vld [vmem:[%s3 + $0x10] sm:$0xff]
        %v520 = vld [vmem:[%s3 + $0x18] sm:$0xff]
        %v521 = vld [vmem:[%s4] sm:$0x1]
        %v523 = vperm.slane %v521, 0
        %v526 = vsel %vm476, %v516, 0
        %528 = vmatpush.msra.mxu0 0.0
        %529 = vmatpush.msra.mxu0 0.0
        %530 = vmatpush.msra.mxu0 0.0
        %531 = vmatpush.msra.mxu0 0.0
        %532 = vmatpush.msra.mxu0 0.0
        %533 = vmatpush.msra.mxu0 0.0
        %534 = vmatpush.msra.mxu0 0.0
        %535 = vmatpush.msra.mxu0 0.0
        %536 = vmatpush.msra.mxu0 0.0
        %537 = vmatpush.msra.mxu0 0.0
        %538 = vmatpush.msra.mxu0 0.0
        %539 = vmatpush.msra.mxu0 0.0
        %540 = vmatpush.msra.mxu0 %v520
        %541 = vmatpush.msra.mxu0 %v519
        %542 = vmatpush.msra.mxu0 %v518
        %543 = vmatpush.msra.mxu0 %v517
        %544 = vmatmul.f32.gmra.mxu0 %v526
        %v545 = vpop.f32.mrf.mxu0
        %v546 = vadd.f32 %v523, %v545
        %547 = vdwg.mxu0
        %v548 = vld [vmem:[%s5] sm:$0xff]
        %v549 = vld [vmem:[%s5 + $0x8] sm:$0xff]
        %v550 = vld [vmem:[%s5 + $0x10] sm:$0xff]
        %v551 = vld [vmem:[%s5 + $0x18] sm:$0xff]
        %553 = vrot.lane.b32.xlu0 %v546, 96
        %v554 = vpop.permute.xlu0 %553
        %vm555 = vcmask 64512
        %v556 = vsel %vm555, %v546, 0
        %v558 = vsel %vm555, %v554, 0
        %560 = vmatpush.xpose.msra.mxu0 0.0
        %561 = vmatpush.xpose.msra.mxu0 0.0
        %562 = vmatpush.xpose.msra.mxu0 0.0
        %563 = vmatpush.xpose.msra.mxu0 0.0
        %564 = vmatpush.xpose.msra.mxu0 0.0
        %565 = vmatpush.xpose.msra.mxu0 0.0
        %566 = vmatpush.xpose.msra.mxu0 0.0
        %567 = vmatpush.xpose.msra.mxu0 0.0
        %568 = vmatpush.xpose.msra.mxu0 0.0
        %569 = vmatpush.xpose.msra.mxu0 0.0
        %570 = vmatpush.xpose.msra.mxu0 0.0
        %571 = vmatpush.xpose.msra.mxu0 0.0
        %572 = vmatpush.xpose.msra.mxu0 0.0
        %573 = vmatpush.xpose.msra.mxu0 0.0
        %574 = vmatpush.xpose.msra.mxu0 0.0
        %575 = vmatpush.xpose.msra.mxu0 %v558
        %576 = vmatmul.f32.gmra.mxu0 %v556
        %v577 = vpop.f32.mrf.mxu0
        %v578 = vadd.f32 0.0, %v577
        %579 = vdwg.mxu0
        %v580 = vsel %vm555, %v578, -inf
        %581 = vmax.xlane.f32.xlu0 %v580
        %v582 = vpop.xlane.xlu0 %581
        %v583 = vsub.f32 %v578, %v582
        %v584 = vmul.f32 %v583, 1.442695
        %v585 = vpow.pop %v584
        %v586 = vsel %vm555, %v585, 0.0
        %587 = vadd.xlane.f32.xlu0 %v586
        %v588 = vpop.xlane.xlu0 %587
        %v589 = vrcp.pop %v588
        %v590 = vmul.f32 %v588, %v589
        %v591 = vsub.f32 1.0, %v590
        %v592 = vmul.f32 %v589, %v591
        %v593 = vadd.f32 %v589, %v592
        %vm594 = vweird.f32 %v588
        %vm595 = vweird.f32 %v589
        %vm596 = vmor %vm594, %vm595
        %v597 = vsel %vm596, %v589, %v593
        %v598 = vand.u32 2147483647, %v588
        %vm599 = vcmp.eq.f32.partialorder %v598, 8.507059e+37
        %v600 = vand.u32 %v588, 2147483648
        %v601 = vor.u32 1.1754944e-38, %v600
        %v602 = vsel %vm599, %v601, %v597
        %v603 = vmul.f32 %v585, %v602
        %604 = vrot.lane.b32.xlu0 %v546, 64
        %v605 = vpop.permute.xlu0 %604
        %v608 = vsel %vm555, %v603, 0
        %610 = vmatpush.msra.mxu0 0.0
        %611 = vmatpush.msra.mxu0 0.0
        %612 = vmatpush.msra.mxu0 0.0
        %613 = vmatpush.msra.mxu0 0.0
        %614 = vmatpush.msra.mxu0 0.0
        %615 = vmatpush.msra.mxu0 0.0
        %616 = vmatpush.msra.mxu0 0.0
        %617 = vmatpush.msra.mxu0 0.0
        %618 = vmatpush.msra.mxu0 0.0
        %619 = vmatpush.msra.mxu0 0.0
        %620 = vmatpush.msra.mxu0 0.0
        %621 = vmatpush.msra.mxu0 0.0
        %622 = vmatpush.msra.mxu0 0.0
        %623 = vmatpush.msra.mxu0 0.0
        %624 = vmatpush.msra.mxu0 0.0
        %625 = vmatpush.msra.mxu0 %v605
        %626 = vmatmul.f32.gmra.mxu0 %v608
        %v627 = vpop.f32.mrf.mxu0
        %v628 = vadd.f32 0.0, %v627
        %629 = vdwg.mxu0
        %630 = vrot.lane.b32.xlu0 %v546, 120
        %v631 = vpop.permute.xlu0 %630
        %632 = vrot.lane.b32.xlu0 %v546, 88
        %v633 = vpop.permute.xlu0 %632
        %v634 = vsel %vm555, %v631, 0
        %v636 = vsel %vm555, %v633, 0
        %638 = vmatpush.xpose.msra.mxu0 0.0
        %639 = vmatpush.xpose.msra.mxu0 0.0
        %640 = vmatpush.xpose.msra.mxu0 0.0
        %641 = vmatpush.xpose.msra.mxu0 0.0
        %642 = vmatpush.xpose.msra.mxu0 0.0
        %643 = vmatpush.xpose.msra.mxu0 0.0
        %644 = vmatpush.xpose.msra.mxu0 0.0
        %645 = vmatpush.xpose.msra.mxu0 0.0
        %646 = vmatpush.xpose.msra.mxu0 0.0
        %647 = vmatpush.xpose.msra.mxu0 0.0
        %648 = vmatpush.xpose.msra.mxu0 0.0
        %649 = vmatpush.xpose.msra.mxu0 0.0
        %650 = vmatpush.xpose.msra.mxu0 0.0
        %651 = vmatpush.xpose.msra.mxu0 0.0
        %652 = vmatpush.xpose.msra.mxu0 0.0
        %653 = vmatpush.xpose.msra.mxu0 %v636
        %654 = vmatmul.f32.gmra.mxu0 %v634
        %v655 = vpop.f32.mrf.mxu0
        %v656 = vadd.f32 0.0, %v655
        %657 = vdwg.mxu0
        %v658 = vsel %vm555, %v656, -inf
        %659 = vmax.xlane.f32.xlu0 %v658
        %v660 = vpop.xlane.xlu0 %659
        %v661 = vsub.f32 %v656, %v660
        %v662 = vmul.f32 %v661, 1.442695
        %v663 = vpow.pop %v662
        %v664 = vsel %vm555, %v663, 0.0
        %665 = vadd.xlane.f32.xlu0 %v664
        %v666 = vpop.xlane.xlu0 %665
        %v667 = vrcp.pop %v666
        %v668 = vmul.f32 %v666, %v667
        %v669 = vsub.f32 1.0, %v668
        %v670 = vmul.f32 %v667, %v669
        %v671 = vadd.f32 %v667, %v670
        %vm672 = vweird.f32 %v666
        %vm673 = vweird.f32 %v667
        %vm674 = vmor %vm672, %vm673
        %v675 = vsel %vm674, %v667, %v671
        %v676 = vand.u32 2147483647, %v666
        %vm677 = vcmp.eq.f32.partialorder %v676, 8.507059e+37
        %v678 = vand.u32 %v666, 2147483648
        %v679 = vor.u32 1.1754944e-38, %v678
        %v680 = vsel %vm677, %v679, %v675
        %v681 = vmul.f32 %v663, %v680
        %682 = vrot.lane.b32.xlu0 %v546, 56
        %v683 = vpop.permute.xlu0 %682
        %v686 = vsel %vm555, %v681, 0
        %688 = vmatpush.msra.mxu0 0.0
        %689 = vmatpush.msra.mxu0 0.0
        %690 = vmatpush.msra.mxu0 0.0
        %691 = vmatpush.msra.mxu0 0.0
        %692 = vmatpush.msra.mxu0 0.0
        %693 = vmatpush.msra.mxu0 0.0
        %694 = vmatpush.msra.mxu0 0.0
        %695 = vmatpush.msra.mxu0 0.0
        %696 = vmatpush.msra.mxu0 0.0
        %697 = vmatpush.msra.mxu0 0.0
        %698 = vmatpush.msra.mxu0 0.0
        %699 = vmatpush.msra.mxu0 0.0
        %700 = vmatpush.msra.mxu0 0.0
        %701 = vmatpush.msra.mxu0 0.0
        %702 = vmatpush.msra.mxu0 0.0
        %703 = vmatpush.msra.mxu0 %v683
        %704 = vmatmul.f32.gmra.mxu0 %v686
        %v705 = vpop.f32.mrf.mxu0
        %v706 = vadd.f32 0.0, %v705
        %707 = vdwg.mxu0
        %v709 = vsel %vm555, %v706, 0
        %711 = vmatpush.msra.mxu0 0.0
        %712 = vmatpush.msra.mxu0 0.0
        %713 = vmatpush.msra.mxu0 0.0
        %714 = vmatpush.msra.mxu0 0.0
        %715 = vmatpush.msra.mxu0 0.0
        %716 = vmatpush.msra.mxu0 0.0
        %717 = vmatpush.msra.mxu0 0.0
        %718 = vmatpush.msra.mxu0 0.0
        %719 = vmatpush.msra.mxu0 0.0
        %720 = vmatpush.msra.mxu0 0.0
        %721 = vmatpush.msra.mxu0 0.0
        %722 = vmatpush.msra.mxu0 0.0
        %723 = vmatpush.msra.mxu0 0.0
        %724 = vmatpush.msra.mxu0 0.0
        %725 = vmatpush.msra.mxu0 0.0
        %726 = vmatpush.msra.mxu0 %v549
        %727 = vmatmul.f32.gmra.mxu0 %v709
        %v728 = vpop.f32.mrf.mxu0
        %v729 = vadd.f32 0.0, %v728
        %730 = vdwg.mxu0
        %v732 = vsel %vm555, %v628, 0
        %734 = vmatpush.msra.mxu0 0.0
        %735 = vmatpush.msra.mxu0 0.0
        %736 = vmatpush.msra.mxu0 0.0
        %737 = vmatpush.msra.mxu0 0.0
        %738 = vmatpush.msra.mxu0 0.0
        %739 = vmatpush.msra.mxu0 0.0
        %740 = vmatpush.msra.mxu0 0.0
        %741 = vmatpush.msra.mxu0 0.0
        %742 = vmatpush.msra.mxu0 0.0
        %743 = vmatpush.msra.mxu0 0.0
        %744 = vmatpush.msra.mxu0 0.0
        %745 = vmatpush.msra.mxu0 0.0
        %746 = vmatpush.msra.mxu0 0.0
        %747 = vmatpush.msra.mxu0 0.0
        %748 = vmatpush.msra.mxu0 0.0
        %749 = vmatpush.msra.mxu0 %v548
        %750 = vmatmul.f32.gmra.mxu0 %v732
        %v751 = vpop.f32.mrf.mxu0
        %v752 = vadd.f32 %v729, %v751
        %753 = vdwg.mxu0
        %754 = vrot.lane.b32.xlu0 %v546, 112
        %v755 = vpop.permute.xlu0 %754
        %756 = vrot.lane.b32.xlu0 %v546, 80
        %v757 = vpop.permute.xlu0 %756
        %v758 = vsel %vm555, %v755, 0
        %v760 = vsel %vm555, %v757, 0
        %762 = vmatpush.xpose.msra.mxu0 0.0
        %763 = vmatpush.xpose.msra.mxu0 0.0
        %764 = vmatpush.xpose.msra.mxu0 0.0
        %765 = vmatpush.xpose.msra.mxu0 0.0
        %766 = vmatpush.xpose.msra.mxu0 0.0
        %767 = vmatpush.xpose.msra.mxu0 0.0
        %768 = vmatpush.xpose.msra.mxu0 0.0
        %769 = vmatpush.xpose.msra.mxu0 0.0
        %770 = vmatpush.xpose.msra.mxu0 0.0
        %771 = vmatpush.xpose.msra.mxu0 0.0
        %772 = vmatpush.xpose.msra.mxu0 0.0
        %773 = vmatpush.xpose.msra.mxu0 0.0
        %774 = vmatpush.xpose.msra.mxu0 0.0
        %775 = vmatpush.xpose.msra.mxu0 0.0
        %776 = vmatpush.xpose.msra.mxu0 0.0
        %777 = vmatpush.xpose.msra.mxu0 %v760
        %778 = vmatmul.f32.gmra.mxu0 %v758
        %v779 = vpop.f32.mrf.mxu0
        %v780 = vadd.f32 0.0, %v779
        %781 = vdwg.mxu0
        %v782 = vsel %vm555, %v780, -inf
        %783 = vmax.xlane.f32.xlu0 %v782
        %v784 = vpop.xlane.xlu0 %783
        %v785 = vsub.f32 %v780, %v784
        %v786 = vmul.f32 %v785, 1.442695
        %v787 = vpow.pop %v786
        %v788 = vsel %vm555, %v787, 0.0
        %789 = vadd.xlane.f32.xlu0 %v788
        %v790 = vpop.xlane.xlu0 %789
        %v791 = vrcp.pop %v790
        %v792 = vmul.f32 %v790, %v791
        %v793 = vsub.f32 1.0, %v792
        %v794 = vmul.f32 %v791, %v793
        %v795 = vadd.f32 %v791, %v794
        %vm796 = vweird.f32 %v790
        %vm797 = vweird.f32 %v791
        %vm798 = vmor %vm796, %vm797
        %v799 = vsel %vm798, %v791, %v795
        %v800 = vand.u32 2147483647, %v790
        %vm801 = vcmp.eq.f32.partialorder %v800, 8.507059e+37
        %v802 = vand.u32 %v790, 2147483648
        %v803 = vor.u32 1.1754944e-38, %v802
        %v804 = vsel %vm801, %v803, %v799
        %v805 = vmul.f32 %v787, %v804
        %806 = vrot.lane.b32.xlu0 %v546, 48
        %v807 = vpop.permute.xlu0 %806
        %v810 = vsel %vm555, %v805, 0
        %812 = vmatpush.msra.mxu0 0.0
        %813 = vmatpush.msra.mxu0 0.0
        %814 = vmatpush.msra.mxu0 0.0
        %815 = vmatpush.msra.mxu0 0.0
        %816 = vmatpush.msra.mxu0 0.0
        %817 = vmatpush.msra.mxu0 0.0
        %818 = vmatpush.msra.mxu0 0.0
        %819 = vmatpush.msra.mxu0 0.0
        %820 = vmatpush.msra.mxu0 0.0
        %821 = vmatpush.msra.mxu0 0.0
        %822 = vmatpush.msra.mxu0 0.0
        %823 = vmatpush.msra.mxu0 0.0
        %824 = vmatpush.msra.mxu0 0.0
        %825 = vmatpush.msra.mxu0 0.0
        %826 = vmatpush.msra.mxu0 0.0
        %827 = vmatpush.msra.mxu0 %v807
        %828 = vmatmul.f32.gmra.mxu0 %v810
        %v829 = vpop.f32.mrf.mxu0
        %v830 = vadd.f32 0.0, %v829
        %831 = vdwg.mxu0
        %v833 = vsel %vm555, %v830, 0
        %835 = vmatpush.msra.mxu0 0.0
        %836 = vmatpush.msra.mxu0 0.0
        %837 = vmatpush.msra.mxu0 0.0
        %838 = vmatpush.msra.mxu0 0.0
        %839 = vmatpush.msra.mxu0 0.0
        %840 = vmatpush.msra.mxu0 0.0
        %841 = vmatpush.msra.mxu0 0.0
        %842 = vmatpush.msra.mxu0 0.0
        %843 = vmatpush.msra.mxu0 0.0
        %844 = vmatpush.msra.mxu0 0.0
        %845 = vmatpush.msra.mxu0 0.0
        %846 = vmatpush.msra.mxu0 0.0
        %847 = vmatpush.msra.mxu0 0.0
        %848 = vmatpush.msra.mxu0 0.0
        %849 = vmatpush.msra.mxu0 0.0
        %850 = vmatpush.msra.mxu0 %v550
        %851 = vmatmul.f32.gmra.mxu0 %v833
        %v852 = vpop.f32.mrf.mxu0
        %v853 = vadd.f32 0.0, %v852
        %854 = vdwg.mxu0
        %v855 = vadd.f32 %v752, %v853
        %856 = vrot.lane.b32.xlu0 %v546, 104
        %v857 = vpop.permute.xlu0 %856
        %858 = vrot.lane.b32.xlu0 %v546, 72
        %v859 = vpop.permute.xlu0 %858
        %v860 = vsel %vm555, %v857, 0
        %v862 = vsel %vm555, %v859, 0
        %864 = vmatpush.xpose.msra.mxu0 0.0
        %865 = vmatpush.xpose.msra.mxu0 0.0
        %866 = vmatpush.xpose.msra.mxu0 0.0
        %867 = vmatpush.xpose.msra.mxu0 0.0
        %868 = vmatpush.xpose.msra.mxu0 0.0
        %869 = vmatpush.xpose.msra.mxu0 0.0
        %870 = vmatpush.xpose.msra.mxu0 0.0
        %871 = vmatpush.xpose.msra.mxu0 0.0
        %872 = vmatpush.xpose.msra.mxu0 0.0
        %873 = vmatpush.xpose.msra.mxu0 0.0
        %874 = vmatpush.xpose.msra.mxu0 0.0
        %875 = vmatpush.xpose.msra.mxu0 0.0
        %876 = vmatpush.xpose.msra.mxu0 0.0
        %877 = vmatpush.xpose.msra.mxu0 0.0
        %878 = vmatpush.xpose.msra.mxu0 0.0
        %879 = vmatpush.xpose.msra.mxu0 %v862
        %880 = vmatmul.f32.gmra.mxu0 %v860
        %v881 = vpop.f32.mrf.mxu0
        %v882 = vadd.f32 0.0, %v881
        %883 = vdwg.mxu0
        %v884 = vsel %vm555, %v882, -inf
        %885 = vmax.xlane.f32.xlu0 %v884
        %v886 = vpop.xlane.xlu0 %885
        %v887 = vsub.f32 %v882, %v886
        %v888 = vmul.f32 %v887, 1.442695
        %v889 = vpow.pop %v888
        %v890 = vsel %vm555, %v889, 0.0
        %891 = vadd.xlane.f32.xlu0 %v890
        %v892 = vpop.xlane.xlu0 %891
        %v893 = vrcp.pop %v892
        %v894 = vmul.f32 %v892, %v893
        %v895 = vsub.f32 1.0, %v894
        %v896 = vmul.f32 %v893, %v895
        %v897 = vadd.f32 %v893, %v896
        %vm898 = vweird.f32 %v892
        %vm899 = vweird.f32 %v893
        %vm900 = vmor %vm898, %vm899
        %v901 = vsel %vm900, %v893, %v897
        %v902 = vand.u32 2147483647, %v892
        %vm903 = vcmp.eq.f32.partialorder %v902, 8.507059e+37
        %v904 = vand.u32 %v892, 2147483648
        %v905 = vor.u32 1.1754944e-38, %v904
        %v906 = vsel %vm903, %v905, %v901
        %v907 = vmul.f32 %v889, %v906
        %908 = vrot.lane.b32.xlu0 %v546, 40
        %v909 = vpop.permute.xlu0 %908
        %v912 = vsel %vm555, %v907, 0
        %914 = vmatpush.msra.mxu0 0.0
        %915 = vmatpush.msra.mxu0 0.0
        %916 = vmatpush.msra.mxu0 0.0
        %917 = vmatpush.msra.mxu0 0.0
        %918 = vmatpush.msra.mxu0 0.0
        %919 = vmatpush.msra.mxu0 0.0
        %920 = vmatpush.msra.mxu0 0.0
        %921 = vmatpush.msra.mxu0 0.0
        %922 = vmatpush.msra.mxu0 0.0
        %923 = vmatpush.msra.mxu0 0.0
        %924 = vmatpush.msra.mxu0 0.0
        %925 = vmatpush.msra.mxu0 0.0
        %926 = vmatpush.msra.mxu0 0.0
        %927 = vmatpush.msra.mxu0 0.0
        %928 = vmatpush.msra.mxu0 0.0
        %929 = vmatpush.msra.mxu0 %v909
        %930 = vmatmul.f32.gmra.mxu0 %v912
        %v931 = vpop.f32.mrf.mxu0
        %v932 = vadd.f32 0.0, %v931
        %933 = vdwg.mxu0
        %v935 = vsel %vm555, %v932, 0
        %937 = vmatpush.msra.mxu0 0.0
        %938 = vmatpush.msra.mxu0 0.0
        %939 = vmatpush.msra.mxu0 0.0
        %940 = vmatpush.msra.mxu0 0.0
        %941 = vmatpush.msra.mxu0 0.0
        %942 = vmatpush.msra.mxu0 0.0
        %943 = vmatpush.msra.mxu0 0.0
        %944 = vmatpush.msra.mxu0 0.0
        %945 = vmatpush.msra.mxu0 0.0
        %946 = vmatpush.msra.mxu0 0.0
        %947 = vmatpush.msra.mxu0 0.0
        %948 = vmatpush.msra.mxu0 0.0
        %949 = vmatpush.msra.mxu0 0.0
        %950 = vmatpush.msra.mxu0 0.0
        %951 = vmatpush.msra.mxu0 0.0
        %952 = vmatpush.msra.mxu0 %v551
        %953 = vmatmul.f32.gmra.mxu0 %v935
        %v954 = vpop.f32.mrf.mxu0
        %v955 = vadd.f32 0.0, %v954
        %956 = vdwg.mxu0
        %v957 = vadd.f32 %v855, %v955
        %v958 = vadd.f32 %v473, %v957
        %v959 = vld [vmem:[%s6] sm:$0x1]
        %v961 = vperm.slane %v959, 0
        %v963 = vadd.f32 %v958, %v961
        %v964 = vld [vmem:[%s7] sm:$0x1]
        %v965 = vld [vmem:[%s8] sm:$0x1]
        %v966 = vsel %vm476, %v963, 0.0
        %967 = vadd.xlane.f32.xlu0 %v966
        %v968 = vpop.xlane.xlu0 %967
        %v969 = vmul.f32 %v968, %v486
        %v970 = vmul.f32 %v963, %v963
        %v971 = vsel %vm476, %v970, 0.0
        %972 = vadd.xlane.f32.xlu0 %v971
        %v973 = vpop.xlane.xlu0 %972
        %v974 = vmul.f32 %v973, %v486
        %v975 = vmul.f32 %v969, %v969
        %v976 = vsub.f32 %v974, %v975
        %v977 = vmax.f32 %v976, 0.0
        %v978 = vsub.f32 %v963, %v969
        %v979 = vadd.f32 %v977, 1e-05
        %v980 = vrsqrt.pop %v979
        %v981 = vmul.f32 %v980, %v979
        %v982 = vmul.f32 %v981, %v980
        %v983 = vmul.f32 0.5, %v982
        %v984 = vsub.f32 1.5, %v983
        %v985 = vmul.f32 %v980, %v984
        %vm986 = vweird.f32 %v979
        %vm987 = vweird.f32 %v980
        %vm988 = vmor %vm986, %vm987
        %v989 = vsel %vm988, %v980, %v985
        %v990 = vmul.f32 %v978, %v989
        %v992 = vperm.slane %v964, 0
        %v994 = vmul.f32 %v990, %v992
        %v996 = vperm.slane %v965, 0
        %v998 = vadd.f32 %v994, %v996
        %v999 = vld [vmem:[%s9] sm:$0xff]
        %v1000 = vld [vmem:[%s9 + $0x8] sm:$0xff]
        %v1001 = vld [vmem:[%s9 + $0x10] sm:$0xff]
        %v1002 = vld [vmem:[%s9 + $0x18] sm:$0xff]
        %v1003 = vld [vmem:[%s10] sm:$0x1]
        %v1005 = vperm.slane %v1003, 0
        %v1008 = vsel %vm476, %v998, 0
        %1010 = vmatpush.msra.mxu0 0.0
        %1011 = vmatpush.msra.mxu0 0.0
        %1012 = vmatpush.msra.mxu0 0.0
        %1013 = vmatpush.msra.mxu0 0.0
        %1014 = vmatpush.msra.mxu0 0.0
        %1015 = vmatpush.msra.mxu0 0.0
        %1016 = vmatpush.msra.mxu0 0.0
        %1017 = vmatpush.msra.mxu0 0.0
        %1018 = vmatpush.msra.mxu0 0.0
        %1019 = vmatpush.msra.mxu0 0.0
        %1020 = vmatpush.msra.mxu0 0.0
        %1021 = vmatpush.msra.mxu0 0.0
        %1022 = vmatpush.msra.mxu0 %v1002
        %1023 = vmatpush.msra.mxu0 %v1001
        %1024 = vmatpush.msra.mxu0 %v1000
        %1025 = vmatpush.msra.mxu0 %v999
        %1026 = vmatmul.f32.gmra.mxu0 %v1008
        %v1027 = vpop.f32.mrf.mxu0
        %v1028 = vadd.f32 %v1005, %v1027
        %1029 = vdwg.mxu0
        %v1030 = vmax.f32 %v1028, 0.0
        %v1031 = vld [vmem:[%s11] sm:$0xff]
        %v1032 = vld [vmem:[%s11 + $0x8] sm:$0xff]
        %v1033 = vld [vmem:[%s11 + $0x10] sm:$0xff]
        %v1034 = vld [vmem:[%s11 + $0x18] sm:$0xff]
        %v1035 = vld [vmem:[%s11 + $0x20] sm:$0xff]
        %v1036 = vld [vmem:[%s11 + $0x28] sm:$0xff]
        %v1037 = vld [vmem:[%s11 + $0x30] sm:$0xff]
        %v1038 = vld [vmem:[%s11 + $0x38] sm:$0xff]
        %v1039 = vld [vmem:[%s12] sm:$0x1]
        %v1041 = vperm.slane %v1039, 0
        %vm1043 = vcmask 523264
        %v1045 = vsel %vm1043, %v1030, 0
        %1047 = vmatpush.msra.mxu0 0.0
        %1048 = vmatpush.msra.mxu0 0.0
        %1049 = vmatpush.msra.mxu0 0.0
        %1050 = vmatpush.msra.mxu0 0.0
        %1051 = vmatpush.msra.mxu0 0.0
        %1052 = vmatpush.msra.mxu0 0.0
        %1053 = vmatpush.msra.mxu0 0.0
        %1054 = vmatpush.msra.mxu0 0.0
        %1055 = vmatpush.msra.mxu0 %v1038
        %1056 = vmatpush.msra.mxu0 %v1037
        %1057 = vmatpush.msra.mxu0 %v1036
        %1058 = vmatpush.msra.mxu0 %v1035
        %1059 = vmatpush.msra.mxu0 %v1034
        %1060 = vmatpush.msra.mxu0 %v1033
        %1061 = vmatpush.msra.mxu0 %v1032
        %1062 = vmatpush.msra.mxu0 %v1031
        %1063 = vmatmul.f32.gmra.mxu0 %v1045
        %v1064 = vpop.f32.mrf.mxu0
        %v1065 = vadd.f32 %v1041, %v1064
        %1066 = vdwg.mxu0
        %v1067 = vadd.f32 %v963, %v1065
        %1068 = vst.msk [vmem:[%s472] sm:$0xff] %vm476, %v1067
        %s1069 = sand.u32 %s317, 1
        %s1070 = scalar_lea.sflag [#allocation4], %s1069
        %s1071 = sand.u32 %s317, 1
        %s1072 = smul.addr %s1071, 8
        %s1073 = scalar_lea.vmem [#allocation7], %s1072
        // Predicated region
        $region81: #{tpu_custom_call.1} parent=71 // pred_check
          %p1074 = pneg %p327
        $region82: #{tpu_custom_call.1} parent=71 // pred_check_branch
          %1076 = sbr.rel (%p1074) target = $region84
        $region83: #{tpu_custom_call.1} parent=71 // pred_region
          %1078 = vsyncadd %s1070, 0
          %s1079 = smul.addr %s31, 8
          %s1080 = scalar_lea.hbm %s13, %s1079
          %s1082 = sshll.u32 %s1073, 4
          %s1083 = int_to_ptr.vmem [resolvable:$true] %s1082
          %s1084 = sshll.u32 %s1080, 4
          %s1085 = int_to_ptr.hbm [resolvable:$true] %s1084
          %1087 = dma.vmem_to_hbm [thread:$0]  %s1083, 128, %s1085, %s1070
        $region84: #{tpu_custom_call.1} parent=71 // pred_fallthru
          _
      $region72: #{tpu_custom_call.1} parent=5 // pred_fallthru
        _
      %p1088 = scmp.le.s32.totalorder 2, %s26
      // Predicated region
      $region85: #{tpu_custom_call.1} parent=5 // pred_check
        %p1089 = pneg %p1088
      $region86: #{tpu_custom_call.1} parent=5 // pred_check_branch
        %1091 = sbr.rel (%p1089) target = $region88
      $region87: #{tpu_custom_call.1} parent=5 // pred_region
        %s1092 = ssub.s32 %s26, 2
        // Predicated region
        $region89: #{tpu_custom_call.1} parent=87 // pred_check
          %p1093 = pneg %p333
        $region90: #{tpu_custom_call.1} parent=87 // pred_check_branch
          %1095 = sbr.rel (%p1093) target = $region92
        $region91: #{tpu_custom_call.1} parent=87 // pred_region
          %s1096 = sand.u32 %s318, 1
          %s1097 = scalar_lea.sflag [#allocation4], %s1096
          %s1098 = sand.u32 %s318, 1
          %s1099 = smul.addr %s1098, 8
          %s1100 = scalar_lea.vmem [#allocation7], %s1099
          %1102 = dma.done %s1097, 128
        $region92: #{tpu_custom_call.1} parent=87 // pred_fallthru
          _
      $region88: #{tpu_custom_call.1} parent=5 // pred_fallthru
        _
    $region6: #{tpu_custom_call.1} parent=1 // loop_footer
      %s30 = sadd.s32 1, %s26
    $region7: #{tpu_custom_call.1} parent=1 // loop_footer_branch
      %25 = sbr.rel target = $region3
    $region8: #{tpu_custom_call.1} parent=1 // loop_exit
      _
    %1103 = vsyncpa [#allocation3], 1
    %s1104 = scalar_lea.sflag [#allocation3], 1
    %1105 = vsyncpa %s1104, 1
    %1106 = vsyncpa [#allocation6], 1
    %1107 = vsyncpa [#allocation4], 1
    %s1108 = scalar_lea.sflag [#allocation4], 1
    %1109 = vsyncpa %s1108, 1

</llo_original>
